<compile_context>
chip_gen: v7x
topology: tpu7x:2x2x1
jax: 0.10.0
libtpu: 0.0.40
codegen_flags: <defaults>
</compile_context>

<pallas_src>
import functools

import jax
import jax.numpy as jnp
from jax.experimental import pallas as pl
from jax.experimental.pallas import tpu as pltpu

# Small test shapes consistent with the module
# (module: vocab=256, embed=256, hidden=4096, batch=128, batch_first sequences).
VOCAB = 256
EMBED = 256
HIDDEN = 128
BATCH = 16
SEQ = 16


# ---------------------------------------------------------------------------
# Tiled linear:  y = x @ w_t + b     (rows AND output columns tiled, 'parallel' grid)
# ---------------------------------------------------------------------------
def linear_kernel(x_ref, w_ref, b_ref, o_ref):
    """(tile_m, K) @ (K, tile_n) + (1, tile_n) -> (tile_m, tile_n); bf16 MXU, f32 accumulation."""
    x = x_ref[...].astype(w_ref.dtype)
    o_ref[...] = (jnp.dot(x, w_ref[...], preferred_element_type=jnp.float32)
                  + b_ref[...]).astype(o_ref.dtype)


def tiled_linear(x, w_t, b, *, tile_m=512, tile_n=2048, out_dtype=jnp.float32):
    """y = x @ w_t + b with a 2D ('parallel','parallel') grid over rows and output columns."""
    M, K = x.shape
    N = w_t.shape[1]
    assert N % 128 == 0

    tile_n = min(tile_n, N)
    while N % tile_n:           # shrink to a multiple of 128 that divides N
        tile_n -= 128
    tile_m = min(tile_m, max(8, M))

    # Pad ragged rows (handles odd T*B) instead of asserting divisibility.
    Mp = pl.cdiv(M, tile_m) * tile_m
    if Mp != M:
        x = jnp.pad(x, ((0, Mp - M), (0, 0)))

    y = pl.pallas_call(
        linear_kernel,
        out_shape=jax.ShapeDtypeStruct((Mp, N), out_dtype),
        grid_spec=pltpu.PrefetchScalarGridSpec(
            num_scalar_prefetch=0,
            grid=(Mp // tile_m, N // tile_n),
            in_specs=[
                pl.BlockSpec((tile_m, K), lambda i, j: (i, 0)),
                pl.BlockSpec((K, tile_n), lambda i, j: (0, j)),
                pl.BlockSpec((1, tile_n), lambda i, j: (0, j)),
            ],
            out_specs=pl.BlockSpec((tile_m, tile_n), lambda i, j: (i, j)),
        ),
        compiler_params=pltpu.CompilerParams(
            dimension_semantics=("parallel", "parallel"),
            vmem_limit_bytes=64 * 1024 * 1024),
    )(x, w_t, b.reshape(1, N))
    return y[:M] if Mp != M else y


# ---------------------------------------------------------------------------
# LSTM recurrence: grid (T, n_gate_chunks), h/c carried in VMEM scratch
# ---------------------------------------------------------------------------
def lstm_recurrence_kernel(w_resident, gx_ref, whh_ref, h0_ref, c0_ref,
                           allh_ref, ht_ref, ct_ref,
                           h_sc, c_sc, gates_sc, w_sc=None):
    """One grid step = one (timestep t, gate-column chunk g).

    gx_ref  : (1, B, tile_g) bf16  streamed chunk of x @ W_ih^T + (b_ih + b_hh)
    whh_ref : resident: (n_g, H, tile_g) bf16 raw HBM ref (pl.ANY)
              streamed: (1, H, tile_g)   bf16 BlockSpec chunk
    h0/c0   : (B, H) f32 initial state (loaded once; constant index_map)
    allh_ref: (1, B, H) f32 output block for timestep t
    ht/ct   : (B, H) f32 final state (written on the last grid step)
    h_sc/c_sc : (B, H) f32 carry scratch
    gates_sc  : (n_g, B, tile_g) f32 gate pre-activations of the current timestep
    w_sc      : (n_g, H, tile_g) bf16 resident copy of W_hh^T (only if w_resident)
    """
    t = pl.program_id(0)
    g = pl.program_id(1)
    n_t = pl.num_programs(0)
    n_g = pl.num_programs(1)
    H = h0_ref.shape[-1]
    tile_g = gx_ref.shape[-1]
    cpg = H // tile_g                      # weight chunks per LSTM gate (static)

    @pl.when((t == 0) & (g == 0))
    def _():
        h_sc[...] = h0_ref[...]
        c_sc[...] = c0_ref[...]

    if w_resident:
        # Copy each chunk on-chip exactly once (first timestep); all later timesteps reuse the
        # VMEM-resident weight -> no per-step HBM re-streaming of W_hh.
        @pl.when(t == 0)
        def _():
            pltpu.sync_copy(whh_ref.at[g], w_sc.at[g])
        w_blk = w_sc[g]                    # (H, tile_g)
    else:
        w_blk = whh_ref[0]                 # (H, tile_g), streamed by BlockSpec

    # Gate-chunk pre-activations: gx + h_{t-1} @ W_hh^T[:, chunk]  (MXU, f32 accumulation).
    gates_sc[g] = gx_ref[0].astype(jnp.float32) + jnp.dot(
        h_sc[...].astype(w_blk.dtype), w_blk, preferred_element_type=jnp.float32)

    @pl.when(g == n_g - 1)
    def _():
        # All 4H gate pre-activations of timestep t are now in gates_sc; run the i/f/g/o
        # nonlinearity + cell update chunk-by-chunk (static slices only).
        # PyTorch LSTM gate order along 4H: input, forget, cell(g), output.
        for j in range(cpg):
            sl = slice(j * tile_g, (j + 1) * tile_g)
            ig = jax.nn.sigmoid(gates_sc[0 * cpg + j])
            fg = jax.nn.sigmoid(gates_sc[1 * cpg + j])
            gg = jnp.tanh(gates_sc[2 * cpg + j])
            og = jax.nn.sigmoid(gates_sc[3 * cpg + j])
            c_new = fg * c_sc[:, sl] + ig * gg
            h_new = og * jnp.tanh(c_new)
            c_sc[:, sl] = c_new
            h_sc[:, sl] = h_new
            allh_ref[0, :, sl] = h_new

    @pl.when((t == n_t - 1) & (g == n_g - 1))
    def _():
        ht_ref[...] = h_sc[...]
        ct_ref[...] = c_sc[...]


def lstm_recurrence(gx_tm, w_hh_chunks, h0, c0, *, w_resident):
    T, B, G4 = gx_tm.shape
    n_g, H, tile_g = w_hh_chunks.shape
    assert G4 == 4 * H == n_g * tile_g

    in_specs = [
        pl.BlockSpec((1, B, tile_g), lambda t, g: (t, 0, g)),      # gx: stream per (t, chunk)
        (pl.BlockSpec(memory_space=pl.ANY) if w_resident           # raw HBM ref, copied once
         else pl.BlockSpec((1, H, tile_g), lambda t, g: (g, 0, 0))),
        pl.BlockSpec((B, H), lambda t, g: (0, 0)),                 # h0 (fetched once)
        pl.BlockSpec((B, H), lambda t, g: (0, 0)),                 # c0 (fetched once)
    ]
    out_specs = [
        pl.BlockSpec((1, B, H), lambda t, g: (t, 0, 0)),           # all_h: streamed per t
        pl.BlockSpec((B, H), lambda t, g: (0, 0)),                 # h_T (written on last step)
        pl.BlockSpec((B, H), lambda t, g: (0, 0)),                 # c_T
    ]
    scratch = [
        pltpu.VMEM((B, H), jnp.float32),                           # h carry
        pltpu.VMEM((B, H), jnp.float32),                           # c carry
        pltpu.VMEM((n_g, B, tile_g), jnp.float32),                 # gate pre-activations
    ]
    if w_resident:
        scratch.append(pltpu.VMEM((n_g, H, tile_g), w_hh_chunks.dtype))

    return pl.pallas_call(
        functools.partial(lstm_recurrence_kernel, w_resident),
        out_shape=(jax.ShapeDtypeStruct((T, B, H), jnp.float32),
                   jax.ShapeDtypeStruct((B, H), jnp.float32),
                   jax.ShapeDtypeStruct((B, H), jnp.float32)),
        grid_spec=pltpu.PrefetchScalarGridSpec(
            num_scalar_prefetch=0,
            grid=(T, n_g),
            in_specs=in_specs,
            out_specs=out_specs,
            scratch_shapes=scratch),
        compiler_params=pltpu.CompilerParams(
            # The recurrence is sequential over t; gate chunks accumulate into shared
            # scratch within a step -> both axes 'arbitrary'.
            dimension_semantics=("arbitrary", "arbitrary"),
            vmem_limit_bytes=64 * 1024 * 1024),
    )(gx_tm, w_hh_chunks, h0, c0)


# ---------------------------------------------------------------------------
# Parameter setup (deterministic) + glue
# ---------------------------------------------------------------------------
def weight_norm(v, g):
    # nn.utils.weight_norm default dim=0: per-output-row L2 norm (eps guard against zero rows).
    norm = jnp.sqrt(jnp.sum(v * v, axis=1, keepdims=True))
    return g * v / jnp.maximum(norm, 1e-12)


def init_params(key):
    ks = jax.random.split(key, 8)
    s = 1.0 / jnp.sqrt(HIDDEN)
    return {
        "embedding": jax.random.normal(ks[0], (VOCAB, EMBED), jnp.float32),
        # weight-norm parametrization (v, g) of the LSTM weights
        "w_ih_v": jax.random.uniform(ks[1], (4 * HIDDEN, EMBED), jnp.float32, -s, s),
        "w_ih_g": jax.random.uniform(ks[2], (4 * HIDDEN, 1), jnp.float32, 0.5, 1.5),
        "w_hh_v": jax.random.uniform(ks[3], (4 * HIDDEN, HIDDEN), jnp.float32, -s, s),
        "w_hh_g": jax.random.uniform(ks[4], (4 * HIDDEN, 1), jnp.float32, 0.5, 1.5),
        "b_ih": jax.random.uniform(ks[5], (4 * HIDDEN,), jnp.float32, -s, s),
        "b_hh": jax.random.uniform(ks[6], (4 * HIDDEN,), jnp.float32, -s, s),
        "w_ro": jax.random.normal(ks[7], (VOCAB, HIDDEN), jnp.float32) * 0.02,
        "b_ro": jnp.zeros((VOCAB,), jnp.float32),
    }


@functools.partial(jax.jit, static_argnames=("stream_whh",))
def lstm_forward(x_tokens, h0, c0, params, stream_whh=False):
    B, T = x_tokens.shape
    E, H, V = EMBED, HIDDEN, VOCAB
    assert H % 128 == 0

    # --- plain-JAX glue: embedding gather, weight-norm, bf16 weight casts ---
    emb = params["embedding"][x_tokens]                        # (B, T, E) f32
    x_tm = jnp.transpose(emb, (1, 0, 2))                       # (T, B, E) time-major
    x_flat = x_tm.reshape(T * B, E).astype(jnp.bfloat16)       # MXU-shaped: M = T*B

    w_ih_t = weight_norm(params["w_ih_v"], params["w_ih_g"]).T.astype(jnp.bfloat16)  # (E, 4H)
    w_hh_t = weight_norm(params["w_hh_v"], params["w_hh_g"]).T.astype(jnp.bfloat16)  # (H, 4H)
    bias = params["b_ih"] + params["b_hh"]                                           # (4H,) f32
    w_ro_t = params["w_ro"].T.astype(jnp.bfloat16)                                   # (H, V)

    # Gate-column chunk size: multiple of 128 that divides H (so chunks align with gates).
    tile_g = min(2048, H)
    while H % tile_g:
        tile_g -= 128
    n_g = (4 * H) // tile_g
    # Gate-chunk-major layout (n_g, H, tile_g); chunk g = W_hh^T[:, g*tile_g:(g+1)*tile_g].
    w_hh_chunks = w_hh_t.reshape(H, n_g, tile_g).transpose(1, 0, 2)
    w_bytes = w_hh_chunks.size * w_hh_chunks.dtype.itemsize
    # Keep W_hh VMEM-resident across all T steps when it fits the budget; otherwise stream it.
    w_resident = (not stream_whh) and (w_bytes <= 32 * 1024 * 1024)

    # --- 1) hoisted input projection: one batched matmul over all timesteps (bf16 output
    #        halves the gx HBM round-trip that the recurrence re-reads) ---
    gx_flat = tiled_linear(x_flat, w_ih_t, bias, out_dtype=jnp.bfloat16)   # (T*B, 4H) bf16
    gx_tm = gx_flat.reshape(T, B, 4 * H)

    # --- 2) sequential recurrence: single pallas_call, grid (T, gate chunks) ---
    allh_tm, h_t, c_t = lstm_recurrence(gx_tm, w_hh_chunks, h0[0], c0[0],
                                        w_resident=w_resident)

    # --- 3) readout on time-major hidden states (free reshape, no HBM transpose first) ---
    logits_flat = tiled_linear(allh_tm.reshape(T * B, H), w_ro_t, params["b_ro"])    # (T*B, V)
    logits = jnp.transpose(logits_flat.reshape(T, B, V), (1, 0, 2))                  # (B, T, V)

    all_h = jnp.transpose(allh_tm, (1, 0, 2))                  # (B, T, H) batch_first
    # PyTorch returns h_t/c_t shaped (num_layers=1, B, H); .detach() is a no-op here.
    return logits, h_t[None], c_t[None], all_h


# ---------------------------------------------------------------------------
# Pure-JAX reference using the same bf16-weight / bf16-gx / f32-accumulation recipe
# ---------------------------------------------------------------------------
def lstm_forward_ref(x_tokens, h0, c0, params):
    H = HIDDEN
    emb = params["embedding"][x_tokens]
    w_ih = weight_norm(params["w_ih_v"], params["w_ih_g"]).astype(jnp.bfloat16)  # (4H, E)
    w_hh = weight_norm(params["w_hh_v"], params["w_hh_g"]).astype(jnp.bfloat16)  # (4H, H)
    b = params["b_ih"] + params["b_hh"]
    w_ro = params["w_ro"].astype(jnp.bfloat16)

    x_tm = jnp.transpose(emb, (1, 0, 2)).astype(jnp.bfloat16)                    # (T, B, E)
    gx = (jnp.einsum("tbe,ge->tbg", x_tm, w_ih,
                     preferred_element_type=jnp.float32) + b).astype(jnp.bfloat16)

    def step(carry, gx_t):
        h, c = carry
        gates = gx_t.astype(jnp.float32) + jnp.dot(
            h.astype(jnp.bfloat16), w_hh.T, preferred_element_type=jnp.float32)
        i = jax.nn.sigmoid(gates[:, 0 * H:1 * H])
        f = jax.nn.sigmoid(gates[:, 1 * H:2 * H])
        g = jnp.tanh(gates[:, 2 * H:3 * H])
        o = jax.nn.sigmoid(gates[:, 3 * H:4 * H])
        c = f * c + i * g
        h = o * jnp.tanh(c)
        return (h, c), h

    (h_t, c_t), allh_tm = jax.lax.scan(step, (h0[0], c0[0]), gx)
    all_h = jnp.transpose(allh_tm, (1, 0, 2))                                    # (B, T, H)
    B, T = x_tokens.shape
    logits = (jnp.dot(all_h.astype(jnp.bfloat16).reshape(B * T, H), w_ro.T,
                      preferred_element_type=jnp.float32)
              + params["b_ro"]).reshape(B, T, -1)
    return logits, h_t[None], c_t[None], all_h


if __name__ == "__main__":
    key = jax.random.PRNGKey(0)
    k_tok, k_param = jax.random.split(key)

    x_tokens = jax.random.randint(k_tok, (BATCH, SEQ), 0, VOCAB, dtype=jnp.int32)
    h0 = jnp.zeros((1, BATCH, HIDDEN), jnp.float32)
    c0 = jnp.zeros((1, BATCH, HIDDEN), jnp.float32)
    params = init_params(k_param)

    # Exercise both W_hh paths: VMEM-resident (default at these shapes) and streamed.
    outs_resident = lstm_forward(x_tokens, h0, c0, params)
    outs_streamed = lstm_forward(x_tokens, h0, c0, params, stream_whh=True)
    jax.block_until_ready((outs_resident, outs_streamed))

    ref = lstm_forward_ref(x_tokens, h0, c0, params)
    for outs in (outs_resident, outs_streamed):
        logits, h_t, c_t, all_h = outs
        assert logits.shape == (BATCH, SEQ, VOCAB)
        assert h_t.shape == (1, BATCH, HIDDEN) and c_t.shape == (1, BATCH, HIDDEN)
        assert all_h.shape == (BATCH, SEQ, HIDDEN)
        for name, got, want in zip(("logits", "h_t", "c_t", "all_h"), outs, ref):
            assert jnp.allclose(got, want, rtol=1e-2, atol=1e-2), name

    print("KERNEL_OK")
</pallas_src>

<mosaic_0001>
module attributes {stable_mosaic.version = 11 : i64} {
  func.func @linear_kernel(%arg0: i32, %arg1: i32, %arg2: memref<256x256xbf16, #tpu.memory_space<vmem>>, %arg3: memref<256x512xbf16, #tpu.memory_space<vmem>>, %arg4: memref<1x512xf32, #tpu.memory_space<vmem>>, %arg5: memref<256x512xbf16, #tpu.memory_space<vmem>>) attributes {dimension_semantics = [#tpu.dimension_semantics<parallel>, #tpu.dimension_semantics<parallel>], iteration_bounds = array<i64: 1, 1>, scalar_prefetch = 0 : i64, scratch_operands = 0 : i64, tpu.core_type = #tpu.core_type<tc>, window_params = [{transform_indices = @transform_0, window_bounds = array<i64: 256, 256>}, {transform_indices = @transform_1, window_bounds = array<i64: 256, 512>}, {transform_indices = @transform_2, window_bounds = array<i64: 1, 512>}, {transform_indices = @transform_3, window_bounds = array<i64: 256, 512>}]} {
    %c0 = arith.constant 0 : index
    %c0_0 = arith.constant 0 : index
    %0 = vector.load %arg2[%c0, %c0_0] : memref<256x256xbf16, #tpu.memory_space<vmem>>, vector<256x256xbf16>
    %c0_1 = arith.constant 0 : index
    %c0_2 = arith.constant 0 : index
    %1 = vector.load %arg3[%c0_1, %c0_2] : memref<256x512xbf16, #tpu.memory_space<vmem>>, vector<256x512xbf16>
    %cst = arith.constant dense<0.000000e+00> : vector<256x512xf32>
    %2 = tpu.matmul %0, %1, %cst {dimension_numbers = #tpu.dot_dimension_numbers<[1], [0], [0], [1], [0, 0, 1, 1], [], []>} : vector<256x256xbf16>, vector<256x512xbf16>, vector<256x512xf32> -> vector<256x512xf32>
    %c0_3 = arith.constant 0 : index
    %c0_4 = arith.constant 0 : index
    %3 = vector.load %arg4[%c0_3, %c0_4] : memref<1x512xf32, #tpu.memory_space<vmem>>, vector<1x512xf32>
    %4 = vector.broadcast %3 : vector<1x512xf32> to vector<256x512xf32>
    %5 = arith.addf %2, %4 : vector<256x512xf32>
    %6 = arith.truncf %5 : vector<256x512xf32> to vector<256x512xbf16>
    %c0_5 = arith.constant 0 : index
    %c0_6 = arith.constant 0 : index
    %7 = vector.load %arg5[%c0_5, %c0_6] : memref<256x512xbf16, #tpu.memory_space<vmem>>, vector<256x512xbf16>
    tpu.vector_store %arg5[%c0_5, %c0_6], %6 {strides = array<i32>} : memref<256x512xbf16, #tpu.memory_space<vmem>>, vector<256x512xbf16>,
    return
  }
  func.func @transform_0(%arg0: i32, %arg1: i32) -> (i32, i32) {
    %c0_i32 = arith.constant 0 : i32
    %c0_i32_0 = arith.constant 0 : i32
    return %arg0, %c0_i32 : i32, i32
  }
  func.func @transform_1(%arg0: i32, %arg1: i32) -> (i32, i32) {
    %c0_i32 = arith.constant 0 : i32
    %c0_i32_0 = arith.constant 0 : i32
    return %c0_i32, %arg1 : i32, i32
  }
  func.func @transform_2(%arg0: i32, %arg1: i32) -> (i32, i32) {
    %c0_i32 = arith.constant 0 : i32
    %c0_i32_0 = arith.constant 0 : i32
    return %c0_i32, %arg1 : i32, i32
  }
  func.func @transform_3(%arg0: i32, %arg1: i32) -> (i32, i32) {
    %c0_i32 = arith.constant 0 : i32
    return %arg0, %arg1 : i32, i32
  }
}

module attributes {stable_mosaic.version = 11 : i64} {
  func.func @lstm_recurrence_kernel(%arg0: i32, %arg1: i32, %arg2: memref<1x16x128xbf16, #tpu.memory_space<vmem>>, %arg3: memref<4x128x128xbf16, #tpu.memory_space<any>>, %arg4: memref<16x128xf32, #tpu.memory_space<vmem>>, %arg5: memref<16x128xf32, #tpu.memory_space<vmem>>, %arg6: memref<1x16x128xf32, #tpu.memory_space<vmem>>, %arg7: memref<16x128xf32, #tpu.memory_space<vmem>>, %arg8: memref<16x128xf32, #tpu.memory_space<vmem>>, %arg9: memref<16x128xf32, #tpu.memory_space<vmem>>, %arg10: memref<16x128xf32, #tpu.memory_space<vmem>>, %arg11: memref<4x16x128xf32, #tpu.memory_space<vmem>>, %arg12: memref<4x128x128xbf16, #tpu.memory_space<vmem>>) attributes {dimension_semantics = [#tpu.dimension_semantics<arbitrary>, #tpu.dimension_semantics<arbitrary>], iteration_bounds = array<i64: 16, 4>, scalar_prefetch = 0 : i64, scratch_operands = 4 : i64, tpu.core_type = #tpu.core_type<tc>, window_params = [{transform_indices = @transform_0, window_bounds = array<i64: 1, 16, 128>}, {}, {pipeline_mode = #tpu.pipeline_mode<synchronous>, transform_indices = @transform_2, window_bounds = array<i64: 16, 128>}, {pipeline_mode = #tpu.pipeline_mode<synchronous>, transform_indices = @transform_3, window_bounds = array<i64: 16, 128>}, {transform_indices = @transform_4, window_bounds = array<i64: 1, 16, 128>}, {pipeline_mode = #tpu.pipeline_mode<synchronous>, transform_indices = @transform_5, window_bounds = array<i64: 16, 128>}, {pipeline_mode = #tpu.pipeline_mode<synchronous>, transform_indices = @transform_6, window_bounds = array<i64: 16, 128>}]} {
    %c0_i32 = arith.constant 0 : i32
    %0 = arith.cmpi eq, %arg0, %c0_i32 : i32
    %c0_i32_0 = arith.constant 0 : i32
    %1 = arith.cmpi eq, %arg1, %c0_i32_0 : i32
    %2 = arith.andi %0, %1 : i1
    %3 = arith.extui %2 : i1 to i32
    %c0_i32_1 = arith.constant 0 : i32
    %4 = arith.cmpi ne, %3, %c0_i32_1 : i32
    scf.if %4 {
      %c0_15 = arith.constant 0 : index
      %c0_16 = arith.constant 0 : index
      %30 = vector.load %arg4[%c0_15, %c0_16] : memref<16x128xf32, #tpu.memory_space<vmem>>, vector<16x128xf32>
      %c0_17 = arith.constant 0 : index
      %c0_18 = arith.constant 0 : index
      %31 = vector.load %arg9[%c0_17, %c0_18] : memref<16x128xf32, #tpu.memory_space<vmem>>, vector<16x128xf32>
      tpu.vector_store %arg9[%c0_17, %c0_18], %30 {strides = array<i32>} : memref<16x128xf32, #tpu.memory_space<vmem>>, vector<16x128xf32>,
      %c0_19 = arith.constant 0 : index
      %c0_20 = arith.constant 0 : index
      %32 = vector.load %arg5[%c0_19, %c0_20] : memref<16x128xf32, #tpu.memory_space<vmem>>, vector<16x128xf32>
      %c0_21 = arith.constant 0 : index
      %c0_22 = arith.constant 0 : index
      %33 = vector.load %arg10[%c0_21, %c0_22] : memref<16x128xf32, #tpu.memory_space<vmem>>, vector<16x128xf32>
      tpu.vector_store %arg10[%c0_21, %c0_22], %32 {strides = array<i32>} : memref<16x128xf32, #tpu.memory_space<vmem>>, vector<16x128xf32>,
    } else {
    }
    %c0_i32_2 = arith.constant 0 : i32
    %5 = arith.cmpi eq, %arg0, %c0_i32_2 : i32
    %6 = arith.extui %5 : i1 to i32
    %c0_i32_3 = arith.constant 0 : i32
    %7 = arith.cmpi ne, %6, %c0_i32_3 : i32
    scf.if %7 {
      "tpu.region"() ({
        %30 = tpu.sem_alloc : memref<!tpu.dma_semaphore, #tpu.memory_space<semaphore_mem>>
        %c0_i32_15 = arith.constant 0 : i32
        %c0_i32_16 = arith.constant 0 : i32
        %31 = tpu.memref_slice %arg3[%arg1, %c0_i32_15, %c0_i32_16] : memref<4x128x128xbf16, #tpu.memory_space<any>> -> memref<1x128x128xbf16, #tpu.memory_space<any>>
        %32 = tpu.memref_squeeze %31 : memref<1x128x128xbf16, #tpu.memory_space<any>> -> memref<128x128xbf16, #tpu.memory_space<any>>
        %c0_i32_17 = arith.constant 0 : i32
        %c0_i32_18 = arith.constant 0 : i32
        %33 = tpu.memref_slice %arg12[%arg1, %c0_i32_17, %c0_i32_18] : memref<4x128x128xbf16, #tpu.memory_space<vmem>> -> memref<1x128x128xbf16, #tpu.memory_space<vmem>>
        %34 = tpu.memref_squeeze %33 : memref<1x128x128xbf16, #tpu.memory_space<vmem>> -> memref<128x128xbf16, #tpu.memory_space<vmem>>
        tpu.enqueue_dma source(%32 : memref<128x128xbf16, #tpu.memory_space<any>>) target(%34 : memref<128x128xbf16, #tpu.memory_space<vmem>>) target_semaphore(%30 : memref<!tpu.dma_semaphore, #tpu.memory_space<semaphore_mem>>)
        %c0_i32_19 = arith.constant 0 : i32
        %c0_i32_20 = arith.constant 0 : i32
        %35 = tpu.memref_slice %arg3[%arg1, %c0_i32_19, %c0_i32_20] : memref<4x128x128xbf16, #tpu.memory_space<any>> -> memref<1x128x128xbf16, #tpu.memory_space<any>>
        %36 = tpu.memref_squeeze %35 : memref<1x128x128xbf16, #tpu.memory_space<any>> -> memref<128x128xbf16, #tpu.memory_space<any>>
        %c0_i32_21 = arith.constant 0 : i32
        %c0_i32_22 = arith.constant 0 : i32
        %37 = tpu.memref_slice %arg12[%arg1, %c0_i32_21, %c0_i32_22] : memref<4x128x128xbf16, #tpu.memory_space<vmem>> -> memref<1x128x128xbf16, #tpu.memory_space<vmem>>
        %38 = tpu.memref_squeeze %37 : memref<1x128x128xbf16, #tpu.memory_space<vmem>> -> memref<128x128xbf16, #tpu.memory_space<vmem>>
        tpu.wait_dma2 semaphore(%30 : memref<!tpu.dma_semaphore, #tpu.memory_space<semaphore_mem>>) src(%36 : memref<128x128xbf16, #tpu.memory_space<any>>) dst(%38 : memref<128x128xbf16, #tpu.memory_space<vmem>>)
        tpu.yield
      }) : () -> ()
    } else {
    }
    %8 = arith.index_cast %arg1 : i32 to index
    %c0 = arith.constant 0 : index
    %c0_4 = arith.constant 0 : index
    %9 = vector.load %arg12[%8, %c0, %c0_4] : memref<4x128x128xbf16, #tpu.memory_space<vmem>>, vector<1x128x128xbf16>
    %10 = vector.shape_cast %9 : vector<1x128x128xbf16> to vector<128x128xbf16>
    %c0_5 = arith.constant 0 : index
    %c0_6 = arith.constant 0 : index
    %c0_7 = arith.constant 0 : index
    %11 = vector.load %arg2[%c0_5, %c0_6, %c0_7] : memref<1x16x128xbf16, #tpu.memory_space<vmem>>, vector<1x16x128xbf16>
    %12 = vector.shape_cast %11 : vector<1x16x128xbf16> to vector<16x128xbf16>
    %13 = arith.extf %12 : vector<16x128xbf16> to vector<16x128xf32>
    %c0_8 = arith.constant 0 : index
    %c0_9 = arith.constant 0 : index
    %14 = vector.load %arg9[%c0_8, %c0_9] : memref<16x128xf32, #tpu.memory_space<vmem>>, vector<16x128xf32>
    %15 = arith.truncf %14 : vector<16x128xf32> to vector<16x128xbf16>
    %cst = arith.constant dense<0.000000e+00> : vector<16x128xf32>
    %16 = tpu.matmul %15, %10, %cst {dimension_numbers = #tpu.dot_dimension_numbers<[1], [0], [0], [1], [0, 0, 1, 1], [], []>} : vector<16x128xbf16>, vector<128x128xbf16>, vector<16x128xf32> -> vector<16x128xf32>
    %17 = arith.addf %13, %16 : vector<16x128xf32>
    %18 = arith.index_cast %arg1 : i32 to index
    %c0_10 = arith.constant 0 : index
    %c0_11 = arith.constant 0 : index
    %19 = vector.load %arg11[%18, %c0_10, %c0_11] : memref<4x16x128xf32, #tpu.memory_space<vmem>>, vector<1x16x128xf32>
    %20 = vector.shape_cast %19 : vector<1x16x128xf32> to vector<16x128xf32>
    %21 = vector.shape_cast %17 : vector<16x128xf32> to vector<1x16x128xf32>
    tpu.vector_store %arg11[%18, %c0_10, %c0_11], %21 {strides = array<i32>} : memref<4x16x128xf32, #tpu.memory_space<vmem>>, vector<1x16x128xf32>,
    %c3_i32 = arith.constant 3 : i32
    %22 = arith.cmpi eq, %arg1, %c3_i32 : i32
    %23 = arith.extui %22 : i1 to i32
    %c0_i32_12 = arith.constant 0 : i32
    %24 = arith.cmpi ne, %23, %c0_i32_12 : i32
    scf.if %24 {
      %c0_15 = arith.constant 0 : index
      %c0_16 = arith.constant 0 : index
      %c0_17 = arith.constant 0 : index
      %30 = vector.load %arg11[%c0_15, %c0_16, %c0_17] : memref<4x16x128xf32, #tpu.memory_space<vmem>>, vector<1x16x128xf32>
      %31 = vector.shape_cast %30 : vector<1x16x128xf32> to vector<16x128xf32>
      %32 = arith.negf %31 : vector<16x128xf32>
      %33 = math.exp %32 : vector<16x128xf32>
      %cst_18 = arith.constant 1.000000e+00 : f32
      %34 = vector.broadcast %cst_18 : f32 to vector<16x128xf32>
      %35 = arith.addf %34, %33 : vector<16x128xf32>
      %36 = arith.divf %34, %35 : vector<16x128xf32>
      %c1 = arith.constant 1 : index
      %c0_19 = arith.constant 0 : index
      %c0_20 = arith.constant 0 : index
      %37 = vector.load %arg11[%c1, %c0_19, %c0_20] : memref<4x16x128xf32, #tpu.memory_space<vmem>>, vector<1x16x128xf32>
      %38 = vector.shape_cast %37 : vector<1x16x128xf32> to vector<16x128xf32>
      %39 = arith.negf %38 : vector<16x128xf32>
      %40 = math.exp %39 : vector<16x128xf32>
      %cst_21 = arith.constant 1.000000e+00 : f32
      %41 = vector.broadcast %cst_21 : f32 to vector<16x128xf32>
      %42 = arith.addf %41, %40 : vector<16x128xf32>
      %43 = arith.divf %41, %42 : vector<16x128xf32>
      %c2 = arith.constant 2 : index
      %c0_22 = arith.constant 0 : index
      %c0_23 = arith.constant 0 : index
      %44 = vector.load %arg11[%c2, %c0_22, %c0_23] : memref<4x16x128xf32, #tpu.memory_space<vmem>>, vector<1x16x128xf32>
      %45 = vector.shape_cast %44 : vector<1x16x128xf32> to vector<16x128xf32>
      %46 = math.tanh %45 : vector<16x128xf32>
      %c3 = arith.constant 3 : index
      %c0_24 = arith.constant 0 : index
      %c0_25 = arith.constant 0 : index
      %47 = vector.load %arg11[%c3, %c0_24, %c0_25] : memref<4x16x128xf32, #tpu.memory_space<vmem>>, vector<1x16x128xf32>
      %48 = vector.shape_cast %47 : vector<1x16x128xf32> to vector<16x128xf32>
      %49 = arith.negf %48 : vector<16x128xf32>
      %50 = math.exp %49 : vector<16x128xf32>
      %cst_26 = arith.constant 1.000000e+00 : f32
      %51 = vector.broadcast %cst_26 : f32 to vector<16x128xf32>
      %52 = arith.addf %51, %50 : vector<16x128xf32>
      %53 = arith.divf %51, %52 : vector<16x128xf32>
      %c0_27 = arith.constant 0 : index
      %c0_28 = arith.constant 0 : index
      %54 = vector.load %arg10[%c0_27, %c0_28] : memref<16x128xf32, #tpu.memory_space<vmem>>, vector<16x128xf32>
      %55 = arith.mulf %43, %54 : vector<16x128xf32>
      %56 = arith.mulf %36, %46 : vector<16x128xf32>
      %57 = arith.addf %55, %56 : vector<16x128xf32>
      %58 = math.tanh %57 : vector<16x128xf32>
      %59 = arith.mulf %53, %58 : vector<16x128xf32>
      %c0_29 = arith.constant 0 : index
      %c0_30 = arith.constant 0 : index
      %60 = vector.load %arg10[%c0_29, %c0_30] : memref<16x128xf32, #tpu.memory_space<vmem>>, vector<16x128xf32>
      tpu.vector_store %arg10[%c0_29, %c0_30], %57 {strides = array<i32>} : memref<16x128xf32, #tpu.memory_space<vmem>>, vector<16x128xf32>,
      %c0_31 = arith.constant 0 : index
      %c0_32 = arith.constant 0 : index
      %61 = vector.load %arg9[%c0_31, %c0_32] : memref<16x128xf32, #tpu.memory_space<vmem>>, vector<16x128xf32>
      tpu.vector_store %arg9[%c0_31, %c0_32], %59 {strides = array<i32>} : memref<16x128xf32, #tpu.memory_space<vmem>>, vector<16x128xf32>,
      %c0_33 = arith.constant 0 : index
      %c0_34 = arith.constant 0 : index
      %c0_35 = arith.constant 0 : index
      %62 = vector.load %arg6[%c0_33, %c0_34, %c0_35] : memref<1x16x128xf32, #tpu.memory_space<vmem>>, vector<1x16x128xf32>
      %63 = vector.shape_cast %62 : vector<1x16x128xf32> to vector<16x128xf32>
      %64 = vector.shape_cast %59 : vector<16x128xf32> to vector<1x16x128xf32>
      tpu.vector_store %arg6[%c0_33, %c0_34, %c0_35], %64 {strides = array<i32>} : memref<1x16x128xf32, #tpu.memory_space<vmem>>, vector<1x16x128xf32>,
    } else {
    }
    %c15_i32 = arith.constant 15 : i32
    %25 = arith.cmpi eq, %arg0, %c15_i32 : i32
    %c3_i32_13 = arith.constant 3 : i32
    %26 = arith.cmpi eq, %arg1, %c3_i32_13 : i32
    %27 = arith.andi %25, %26 : i1
    %28 = arith.extui %27 : i1 to i32
    %c0_i32_14 = arith.constant 0 : i32
    %29 = arith.cmpi ne, %28, %c0_i32_14 : i32
    scf.if %29 {
      %c0_15 = arith.constant 0 : index
      %c0_16 = arith.constant 0 : index
      %30 = vector.load %arg9[%c0_15, %c0_16] : memref<16x128xf32, #tpu.memory_space<vmem>>, vector<16x128xf32>
      %c0_17 = arith.constant 0 : index
      %c0_18 = arith.constant 0 : index
      %31 = vector.load %arg7[%c0_17, %c0_18] : memref<16x128xf32, #tpu.memory_space<vmem>>, vector<16x128xf32>
      tpu.vector_store %arg7[%c0_17, %c0_18], %30 {strides = array<i32>} : memref<16x128xf32, #tpu.memory_space<vmem>>, vector<16x128xf32>,
      %c0_19 = arith.constant 0 : index
      %c0_20 = arith.constant 0 : index
      %32 = vector.load %arg10[%c0_19, %c0_20] : memref<16x128xf32, #tpu.memory_space<vmem>>, vector<16x128xf32>
      %c0_21 = arith.constant 0 : index
      %c0_22 = arith.constant 0 : index
      %33 = vector.load %arg8[%c0_21, %c0_22] : memref<16x128xf32, #tpu.memory_space<vmem>>, vector<16x128xf32>
      tpu.vector_store %arg8[%c0_21, %c0_22], %32 {strides = array<i32>} : memref<16x128xf32, #tpu.memory_space<vmem>>, vector<16x128xf32>,
    } else {
    }
    return
  }
  func.func @transform_0(%arg0: i32, %arg1: i32) -> (i32, i32, i32) {
    %c0_i32 = arith.constant 0 : i32
    %c0_i32_0 = arith.constant 0 : i32
    return %arg0, %c0_i32, %arg1 : i32, i32, i32
  }
  func.func @transform_2(%arg0: i32, %arg1: i32) -> (i32, i32) {
    %c0_i32 = arith.constant 0 : i32
    %c0_i32_0 = arith.constant 0 : i32
    %c0_i32_1 = arith.constant 0 : i32
    return %c0_i32, %c0_i32_0 : i32, i32
  }
  func.func @transform_3(%arg0: i32, %arg1: i32) -> (i32, i32) {
    %c0_i32 = arith.constant 0 : i32
    %c0_i32_0 = arith.constant 0 : i32
    %c0_i32_1 = arith.constant 0 : i32
    return %c0_i32, %c0_i32_0 : i32, i32
  }
  func.func @transform_4(%arg0: i32, %arg1: i32) -> (i32, i32, i32) {
    %c0_i32 = arith.constant 0 : i32
    %c0_i32_0 = arith.constant 0 : i32
    %c0_i32_1 = arith.constant 0 : i32
    return %arg0, %c0_i32, %c0_i32_0 : i32, i32, i32
  }
  func.func @transform_5(%arg0: i32, %arg1: i32) -> (i32, i32) {
    %c0_i32 = arith.constant 0 : i32
    %c0_i32_0 = arith.constant 0 : i32
    %c0_i32_1 = arith.constant 0 : i32
    return %c0_i32, %c0_i32_0 : i32, i32
  }
  func.func @transform_6(%arg0: i32, %arg1: i32) -> (i32, i32) {
    %c0_i32 = arith.constant 0 : i32
    %c0_i32_0 = arith.constant 0 : i32
    %c0_i32_1 = arith.constant 0 : i32
    return %c0_i32, %c0_i32_0 : i32, i32
  }
}

module attributes {stable_mosaic.version = 11 : i64} {
  func.func @linear_kernel(%arg0: i32, %arg1: i32, %arg2: memref<256x128xf32, #tpu.memory_space<vmem>>, %arg3: memref<128x256xbf16, #tpu.memory_space<vmem>>, %arg4: memref<1x256xf32, #tpu.memory_space<vmem>>, %arg5: memref<256x256xf32, #tpu.memory_space<vmem>>) attributes {dimension_semantics = [#tpu.dimension_semantics<parallel>, #tpu.dimension_semantics<parallel>], iteration_bounds = array<i64: 1, 1>, scalar_prefetch = 0 : i64, scratch_operands = 0 : i64, tpu.core_type = #tpu.core_type<tc>, window_params = [{transform_indices = @transform_0, window_bounds = array<i64: 256, 128>}, {transform_indices = @transform_1, window_bounds = array<i64: 128, 256>}, {transform_indices = @transform_2, window_bounds = array<i64: 1, 256>}, {transform_indices = @transform_3, window_bounds = array<i64: 256, 256>}]} {
    %c0 = arith.constant 0 : index
    %c0_0 = arith.constant 0 : index
    %0 = vector.load %arg2[%c0, %c0_0] : memref<256x128xf32, #tpu.memory_space<vmem>>, vector<256x128xf32>
    %1 = arith.truncf %0 : vector<256x128xf32> to vector<256x128xbf16>
    %c0_1 = arith.constant 0 : index
    %c0_2 = arith.constant 0 : index
    %2 = vector.load %arg3[%c0_1, %c0_2] : memref<128x256xbf16, #tpu.memory_space<vmem>>, vector<128x256xbf16>
    %cst = arith.constant dense<0.000000e+00> : vector<256x256xf32>
    %3 = tpu.matmul %1, %2, %cst {dimension_numbers = #tpu.dot_dimension_numbers<[1], [0], [0], [1], [0, 0, 1, 1], [], []>} : vector<256x128xbf16>, vector<128x256xbf16>, vector<256x256xf32> -> vector<256x256xf32>
    %c0_3 = arith.constant 0 : index
    %c0_4 = arith.constant 0 : index
    %4 = vector.load %arg4[%c0_3, %c0_4] : memref<1x256xf32, #tpu.memory_space<vmem>>, vector<1x256xf32>
    %5 = vector.broadcast %4 : vector<1x256xf32> to vector<256x256xf32>
    %6 = arith.addf %3, %5 : vector<256x256xf32>
    %c0_5 = arith.constant 0 : index
    %c0_6 = arith.constant 0 : index
    %7 = vector.load %arg5[%c0_5, %c0_6] : memref<256x256xf32, #tpu.memory_space<vmem>>, vector<256x256xf32>
    tpu.vector_store %arg5[%c0_5, %c0_6], %6 {strides = array<i32>} : memref<256x256xf32, #tpu.memory_space<vmem>>, vector<256x256xf32>,
    return
  }
  func.func @transform_0(%arg0: i32, %arg1: i32) -> (i32, i32) {
    %c0_i32 = arith.constant 0 : i32
    %c0_i32_0 = arith.constant 0 : i32
    return %arg0, %c0_i32 : i32, i32
  }
  func.func @transform_1(%arg0: i32, %arg1: i32) -> (i32, i32) {
    %c0_i32 = arith.constant 0 : i32
    %c0_i32_0 = arith.constant 0 : i32
    return %c0_i32, %arg1 : i32, i32
  }
  func.func @transform_2(%arg0: i32, %arg1: i32) -> (i32, i32) {
    %c0_i32 = arith.constant 0 : i32
    %c0_i32_0 = arith.constant 0 : i32
    return %c0_i32, %arg1 : i32, i32
  }
  func.func @transform_3(%arg0: i32, %arg1: i32) -> (i32, i32) {
    %c0_i32 = arith.constant 0 : i32
    return %arg0, %arg1 : i32, i32
  }
}

</mosaic_0001>

<llo_original>
// kernel: lstm_forward.4
$region0: #{lstm_forward.4}
  #allocation0 [shape = 'u32[]', space=smem, size = 0x4, offset = 0x4, fixed_abs, tag = 'smem constant byte address 0x4 - core index']
  #allocation1 [shape = 'u32[144,128]{1,0:T(1,128)}', space=vmem, size = 0x12000, scoped, tag = 'internal scratch']
  #allocation2 [shape = 'f32[16,128]{1,0:T(8,128)}', space=vmem, size = 0x2000, scoped, tag = 'scratch operand']
  #allocation3 [shape = 'f32[16,128]{1,0:T(8,128)}', space=vmem, size = 0x2000, scoped, tag = 'scratch operand']
  #allocation4 [shape = 'f32[4,16,128]{2,1,0:T(8,128)}', space=vmem, size = 0x8000, scoped, tag = 'scratch operand']
  #allocation5 [shape = 'bf16[4,128,128]{2,1,0:T(16,128)(2,1)}', space=vmem, size = 0x20000, scoped, tag = 'scratch operand']
  #allocation17 [shape = 's32[]', space=sflag, size = 0x4, offset = 0, fixed_abs, tag = 'sflag constant byte address 0x0 - dummy sync flag']
  #allocation18 [shape = 's32[]', space=sflag, size = 0x4, offset = 0, fixed_abs, tag = 'sflag constant byte address 0x0 - dummy sync flag']
  #allocation19 [shape = 'u32[]', space=smem, size = 0x4, offset = 0x44, fixed_abs, tag = 'smem constant byte address 0x44 - assertion arg 0']
  #allocation20 [shape = 'u32[]', space=smem, size = 0x4, offset = 0x48, fixed_abs, tag = 'smem constant byte address 0x48 - assertion arg 1']
  %s0 = inlined_call_operand.hbm [shape: bf16[16,16,512], index: 0, kind: input, shape index: {}]
  %s1 = inlined_call_operand.hbm [shape: bf16[4,128,128], index: 1, kind: input, shape index: {}]
  %s2 = inlined_call_operand.hbm [shape: f32[16,128], index: 2, kind: input, shape index: {}]
  %s3 = inlined_call_operand.hbm [shape: f32[16,128], index: 3, kind: input, shape index: {}]
  %s4 = inlined_call_operand.hbm [shape: f32[16,16,128], index: 4, kind: output, shape index: {0}]
  %s5 = inlined_call_operand.hbm [shape: f32[16,128], index: 5, kind: output, shape index: {1}]
  %s6 = inlined_call_operand.hbm [shape: f32[16,128], index: 6, kind: output, shape index: {2}]
  %7 = xla_tuple %s4, %s5, %s6
  %s8 = sld [smem:[#allocation0]]
  $region94: #{lstm_forward.4} parent=0
    _
  %s10 = ssub.s32 1, %s8
  %s11 = scalar_select 0, %s10, %s8
  $region1: #{lstm_forward.4} parent=0
    #allocation6 [shape = 'u8[8192]{0}', space=vmem, size = 0x2000, scoped, tag = 'input window, operand 0']
    #allocation7 [shape = 's32[2]{0}', space=sflag, size = 0x8, scoped, tag = 'scoped memory for lstm_forward.4']
    #allocation8 [shape = 's32[2]{0}', space=sflag, size = 0x8, scoped, tag = 'scoped memory for lstm_forward.4']
    #allocation9 [shape = 'u8[8192]{0}', space=vmem, size = 0x2000, scoped, tag = 'input window, operand 2, single buffered']
    #allocation10 [shape = 's32[1]{0}', space=sflag, size = 0x4, scoped, tag = 'scoped memory for lstm_forward.4']
    #allocation11 [shape = 'u8[8192]{0}', space=vmem, size = 0x2000, scoped, tag = 'input window, operand 3, single buffered']
    #allocation12 [shape = 'u8[16384]{0}', space=vmem, size = 0x4000, scoped, tag = 'output window, operand 0']
    #allocation13 [shape = 'u8[8192]{0}', space=vmem, size = 0x2000, scoped, tag = 'output window, operand 1, single buffered']
    #allocation14 [shape = 's32[1]{0}', space=sflag, size = 0x4, scoped, tag = 'scoped memory for lstm_forward.4']
    #allocation15 [shape = 'u8[8192]{0}', space=vmem, size = 0x2000, scoped, tag = 'output window, operand 2, single buffered']
    %12 = vsyncpa [#allocation7], 0
    %s13 = scalar_lea.sflag [#allocation7], 1
    %14 = vsyncpa %s13, 0
    %15 = vsyncpa [#allocation10], 0
    %16 = vsyncpa [#allocation8], 0
    %s17 = scalar_lea.sflag [#allocation8], 1
    %18 = vsyncpa %s17, 0
    %19 = vsyncpa [#allocation14], 0
    loop: start=0, step=1, limit=66
    $region2: #{lstm_forward.4} parent=1 // loop_pre_header
      _
    $region3: #{lstm_forward.4} parent=1 // loop_header
      %s21 = sphi 0, %s25
      %p22 = scmp.ge.s32.totalorder %s21, 66
      %s28 = sphi 0, %s40
      %s29 = sphi 0, %s36
      %s30 = sphi 0, %s28
      %s31 = sphi 0, %s29
      %s32 = sphi 0, %s30
      %s33 = sphi 0, %s31
      %s45 = sphi 0, %s47
      %s48 = sphi 0, %s45
      %s49 = sphi 0, %s48
      %s65 = sphi 0, %s49
      %s69 = sphi 0, %s69
      %s71 = sphi 0, %s69
      %s72 = sphi 0, %s71
      %s86 = sphi 0, %s72
      %s90 = sphi 0, %s90
      %s92 = sphi 0, %s90
      %s93 = sphi 0, %s92
      %s107 = sphi 0, %s93
      %s113 = sphi 0, %s115
      %s116 = sphi 0, %s113
      %s117 = sphi 0, %s116
      %s133 = sphi 0, %s117
      %s137 = sphi 0, %s137
      %s139 = sphi 0, %s137
      %s140 = sphi 0, %s139
      %s154 = sphi 0, %s140
      %s158 = sphi 0, %s158
      %s160 = sphi 0, %s158
      %s161 = sphi 0, %s160
      %s175 = sphi 0, %s161
    $region4: #{lstm_forward.4} parent=1 // loop_header_branch
      %24 = sbr.rel (%p22) target = $region8
    $region5: #{lstm_forward.4} parent=1 // loop_body
      %s26 = ssub.s32 %s21, 1
      %s27 = ssub.s32 %s21, 2
      %s34 = sadd.s32 1, %s29
      %p35 = scmp.ge.s32.totalorder %s34, 4
      %s36 = scalar_select %p35, 0, %s34
      %s37 = sadd.s32 1, %s28
      %s38 = scalar_select %p35, %s37, %s28
      %p39 = scmp.ge.s32.totalorder %s38, 16
      %s40 = scalar_select %p39, 0, %s38
      %s41 = ssub.s32 %s28, %s40
      %s42 = ssub.s32 %s29, %s36
      %s43 = sor.u32 %s41, %s42
      %p44 = scmp.eq.s32.totalorder %s43, 0
      %s46 = sadd.s32 %s45, 1
      %s47 = scalar_select %p44, %s45, %s46
      %p50 = pneg %p44
      %p51 = scmp.eq.s32.totalorder %s21, 63
      %p52 = por %p50, %p51
      %p53 = scmp.ne.s32.totalorder %s45, %s48
      %p54 = scmp.eq.s32.totalorder %s21, 0
      %p55 = por %p53, %p54
      %p56 = scmp.ne.s32.totalorder %s45, %s48
      %p57 = scmp.eq.s32.totalorder %s26, 63
      %p58 = por %p56, %p57
      %p59 = scmp.ne.s32.totalorder %s48, %s49
      %p60 = scmp.eq.s32.totalorder %s26, 0
      %p61 = por %p59, %p60
      %p62 = scmp.ne.s32.totalorder %s48, %s49
      %p63 = scmp.eq.s32.totalorder %s27, 63
      %p64 = por %p62, %p63
      %p66 = scmp.ne.s32.totalorder %s49, %s65
      %p67 = scmp.eq.s32.totalorder %s27, 0
      %p68 = por %p66, %p67
      %s70 = sadd.s32 %s69, 1
      %p73 = scmp.eq.s32.totalorder %s21, 63
      %p74 = scmp.ne.s32.totalorder %s69, %s71
      %p75 = scmp.eq.s32.totalorder %s21, 0
      %p76 = por %p74, %p75
      %p77 = scmp.ne.s32.totalorder %s69, %s71
      %p78 = scmp.eq.s32.totalorder %s26, 63
      %p79 = por %p77, %p78
      %p80 = scmp.ne.s32.totalorder %s71, %s72
      %p81 = scmp.eq.s32.totalorder %s26, 0
      %p82 = por %p80, %p81
      %p83 = scmp.ne.s32.totalorder %s71, %s72
      %p84 = scmp.eq.s32.totalorder %s27, 63
      %p85 = por %p83, %p84
      %p87 = scmp.ne.s32.totalorder %s72, %s86
      %p88 = scmp.eq.s32.totalorder %s27, 0
      %p89 = por %p87, %p88
      %s91 = sadd.s32 %s90, 1
      %p94 = scmp.eq.s32.totalorder %s21, 63
      %p95 = scmp.ne.s32.totalorder %s90, %s92
      %p96 = scmp.eq.s32.totalorder %s21, 0
      %p97 = por %p95, %p96
      %p98 = scmp.ne.s32.totalorder %s90, %s92
      %p99 = scmp.eq.s32.totalorder %s26, 63
      %p100 = por %p98, %p99
      %p101 = scmp.ne.s32.totalorder %s92, %s93
      %p102 = scmp.eq.s32.totalorder %s26, 0
      %p103 = por %p101, %p102
      %p104 = scmp.ne.s32.totalorder %s92, %s93
      %p105 = scmp.eq.s32.totalorder %s27, 63
      %p106 = por %p104, %p105
      %p108 = scmp.ne.s32.totalorder %s93, %s107
      %p109 = scmp.eq.s32.totalorder %s27, 0
      %p110 = por %p108, %p109
      %s111 = ssub.s32 %s28, %s40
      %p112 = scmp.eq.s32.totalorder %s111, 0
      %s114 = sadd.s32 %s113, 1
      %s115 = scalar_select %p112, %s113, %s114
      %p118 = pneg %p112
      %p119 = scmp.eq.s32.totalorder %s21, 63
      %p120 = por %p118, %p119
      %p121 = scmp.ne.s32.totalorder %s113, %s116
      %p122 = scmp.eq.s32.totalorder %s21, 0
      %p123 = por %p121, %p122
      %p124 = scmp.ne.s32.totalorder %s113, %s116
      %p125 = scmp.eq.s32.totalorder %s26, 63
      %p126 = por %p124, %p125
      %p127 = scmp.ne.s32.totalorder %s116, %s117
      %p128 = scmp.eq.s32.totalorder %s26, 0
      %p129 = por %p127, %p128
      %p130 = scmp.ne.s32.totalorder %s116, %s117
      %p131 = scmp.eq.s32.totalorder %s27, 63
      %p132 = por %p130, %p131
      %p134 = scmp.ne.s32.totalorder %s117, %s133
      %p135 = scmp.eq.s32.totalorder %s27, 0
      %p136 = por %p134, %p135
      %s138 = sadd.s32 %s137, 1
      %p141 = scmp.eq.s32.totalorder %s21, 63
      %p142 = scmp.ne.s32.totalorder %s137, %s139
      %p143 = scmp.eq.s32.totalorder %s21, 0
      %p144 = por %p142, %p143
      %p145 = scmp.ne.s32.totalorder %s137, %s139
      %p146 = scmp.eq.s32.totalorder %s26, 63
      %p147 = por %p145, %p146
      %p148 = scmp.ne.s32.totalorder %s139, %s140
      %p149 = scmp.eq.s32.totalorder %s26, 0
      %p150 = por %p148, %p149
      %p151 = scmp.ne.s32.totalorder %s139, %s140
      %p152 = scmp.eq.s32.totalorder %s27, 63
      %p153 = por %p151, %p152
      %p155 = scmp.ne.s32.totalorder %s140, %s154
      %p156 = scmp.eq.s32.totalorder %s27, 0
      %p157 = por %p155, %p156
      %s159 = sadd.s32 %s158, 1
      %p162 = scmp.eq.s32.totalorder %s21, 63
      %p163 = scmp.ne.s32.totalorder %s158, %s160
      %p164 = scmp.eq.s32.totalorder %s21, 0
      %p165 = por %p163, %p164
      %p166 = scmp.ne.s32.totalorder %s158, %s160
      %p167 = scmp.eq.s32.totalorder %s26, 63
      %p168 = por %p166, %p167
      %p169 = scmp.ne.s32.totalorder %s160, %s161
      %p170 = scmp.eq.s32.totalorder %s26, 0
      %p171 = por %p169, %p170
      %p172 = scmp.ne.s32.totalorder %s160, %s161
      %p173 = scmp.eq.s32.totalorder %s27, 63
      %p174 = por %p172, %p173
      %p176 = scmp.ne.s32.totalorder %s161, %s175
      %p177 = scmp.eq.s32.totalorder %s27, 0
      %p178 = por %p176, %p177
      %p179 = scmp.le.s32.totalorder 1, %s21
      %p180 = scmp.lt.s32.totalorder %s21, 65
      %p181 = pnand %p179, %p180
      %p182 = pneg %p181
      // Predicated region
      $region9: #{lstm_forward.4} parent=5 // pred_check
        _
      $region10: #{lstm_forward.4} parent=5 // pred_check_branch
        %184 = sbr.rel (%p181) target = $region12
      $region11: #{lstm_forward.4} parent=5 // pred_region
        %s185 = ssub.s32 %s21, 1
        // Predicated region
        $region13: #{lstm_forward.4} parent=11 // pred_check
          %p186 = pneg %p82
        $region14: #{lstm_forward.4} parent=11 // pred_check_branch
          %188 = sbr.rel (%p186) target = $region16
        $region15: #{lstm_forward.4} parent=11 // pred_region
          %s190 = ssub.s32 256, 256
          %191 = vsyncadd [#allocation10], %s190
          %s192 = sshll.u32 [#allocation9], 4
          %s193 = int_to_ptr.vmem [resolvable:$true] %s192
          %198 = dma.hbm_to_vmem [thread:$0]  %s2, 256, %s193, [#allocation10], 128, 128, 8
        $region16: #{lstm_forward.4} parent=11 // pred_fallthru
          _
        // Predicated region
        $region17: #{lstm_forward.4} parent=11 // pred_check
          %p199 = pneg %p103
        $region18: #{lstm_forward.4} parent=11 // pred_check_branch
          %201 = sbr.rel (%p199) target = $region20
        $region19: #{lstm_forward.4} parent=11 // pred_region
          %s203 = ssub.s32 256, 256
          %204 = vsyncadd [#allocation10], %s203
          %s205 = sshll.u32 [#allocation11], 4
          %s206 = int_to_ptr.vmem [resolvable:$true] %s205
          %211 = dma.hbm_to_vmem [thread:$0]  %s3, 256, %s206, [#allocation10], 128, 128, 8
        $region20: #{lstm_forward.4} parent=11 // pred_fallthru
          _
      $region12: #{lstm_forward.4} parent=5 // pred_fallthru
        _
      %p212 = scmp.lt.s32.totalorder %s21, 64
      // Predicated region
      $region21: #{lstm_forward.4} parent=5 // pred_check
        %p213 = pneg %p212
      $region22: #{lstm_forward.4} parent=5 // pred_check_branch
        %215 = sbr.rel (%p213) target = $region24
      $region23: #{lstm_forward.4} parent=5 // pred_region
        // Predicated region
        $region25: #{lstm_forward.4} parent=23 // pred_check
          %p216 = pneg %p55
        $region26: #{lstm_forward.4} parent=23 // pred_check_branch
          %218 = sbr.rel (%p216) target = $region28
        $region27: #{lstm_forward.4} parent=23 // pred_region
          %s219 = sand.u32 %s45, 1
          %s220 = scalar_lea.sflag [#allocation7], %s219
          %s221 = sand.u32 %s45, 1
          %s222 = smul.addr %s221, 8
          %s223 = scalar_lea.vmem [#allocation6], %s222
          %s225 = ssub.s32 128, 128
          %226 = vsyncadd %s220, %s225
          %s227 = smul.addr %s28, 8
          %s228 = sadd.s32 %s29, %s227
          %s229 = smul.addr %s228, 64
          %s230 = scalar_lea.hbm %s0, %s229
          %s231 = sshll.u32 %s223, 4
          %s232 = int_to_ptr.vmem [resolvable:$true] %s231
          %237 = dma.hbm_to_vmem [thread:$0]  %s230, 128, %s232, %s220, 256, 64, 4
        $region28: #{lstm_forward.4} parent=23 // pred_fallthru
          _
      $region24: #{lstm_forward.4} parent=5 // pred_fallthru
        _
      %p238 = scmp.le.s32.totalorder 1, %s21
      %p239 = scmp.lt.s32.totalorder %s21, 65
      %p240 = pnand %p238, %p239
      %p241 = pneg %p240
      // Predicated region
      $region29: #{lstm_forward.4} parent=5 // pred_check
        _
      $region30: #{lstm_forward.4} parent=5 // pred_check_branch
        %243 = sbr.rel (%p240) target = $region32
      $region31: #{lstm_forward.4} parent=5 // pred_region
        %s244 = ssub.s32 %s21, 1
        %s245 = sand.u32 %s48, 1
        %s246 = scalar_lea.sflag [#allocation7], %s245
        %s247 = sand.u32 %s48, 1
        %s248 = smul.addr %s247, 8
        %s249 = scalar_lea.vmem [#allocation6], %s248
        // Predicated region
        $region33: #{lstm_forward.4} parent=31 // pred_check
          %p250 = pneg %p61
        $region34: #{lstm_forward.4} parent=31 // pred_check_branch
          %252 = sbr.rel (%p250) target = $region36
        $region35: #{lstm_forward.4} parent=31 // pred_region
          %253 = dma.done %s246, 128
        $region36: #{lstm_forward.4} parent=31 // pred_fallthru
          _
        // Predicated region
        $region37: #{lstm_forward.4} parent=31 // pred_check
          %p254 = pneg %p82
        $region38: #{lstm_forward.4} parent=31 // pred_check_branch
          %256 = sbr.rel (%p254) target = $region40
        $region39: #{lstm_forward.4} parent=31 // pred_region
          %257 = dma.done [#allocation10], 256
        $region40: #{lstm_forward.4} parent=31 // pred_fallthru
          _
        // Predicated region
        $region41: #{lstm_forward.4} parent=31 // pred_check
          %p258 = pneg %p103
        $region42: #{lstm_forward.4} parent=31 // pred_check_branch
          %260 = sbr.rel (%p258) target = $region44
        $region43: #{lstm_forward.4} parent=31 // pred_region
          %261 = dma.done [#allocation10], 256
        $region44: #{lstm_forward.4} parent=31 // pred_fallthru
          _
        %s262 = sand.u32 %s48, 1
        %s263 = scalar_lea.sflag [#allocation7], %s262
        %s264 = sand.u32 %s48, 1
        %s265 = smul.addr %s264, 8
        %s266 = scalar_lea.vmem [#allocation6], %s265
        %p267 = pneg %p61
        %p268 = pneg %p58
        %p269 = pneg %p82
        %p270 = pneg %p79
        %p271 = pneg %p103
        %p272 = pneg %p100
        %p273 = pneg %p129
        %p274 = pneg %p126
        %s275 = sand.u32 %s116, 1
        %s276 = scalar_lea.sflag [#allocation8], %s275
        %s277 = sand.u32 %s116, 1
        %s278 = smul.addr %s277, 16
        %s279 = scalar_lea.vmem [#allocation12], %s278
        %p280 = pneg %p150
        %p281 = pneg %p147
        %p282 = pneg %p171
        %p283 = pneg %p168
        %p285 = scmp.eq.s32.totalorder %s30, 0
        %p286 = scmp.eq.s32.totalorder %s31, 0
        %p287 = pnand %p285, %p286
        %p288 = pneg %p287
        // Predicated region
        $region45: #{lstm_forward.4} parent=31 // pred_check
          _
        $region46: #{lstm_forward.4} parent=31 // pred_check_branch
          %290 = sbr.rel (%p287) target = $region48
        $region47: #{lstm_forward.4} parent=31 // pred_region
          %v291 = vld [vmem:[#allocation9] sm:$0xff]
          %v292 = vld [vmem:[#allocation9 + $0x8] sm:$0xff]
          %293 = vst [vmem:[#allocation2] sm:$0xff] %v291
          %294 = vst [vmem:[#allocation2 + $0x8] sm:$0xff] %v292
          %v295 = vld [vmem:[#allocation11] sm:$0xff]
          %v296 = vld [vmem:[#allocation11 + $0x8] sm:$0xff]
          %297 = vst [vmem:[#allocation3] sm:$0xff] %v295
          %298 = vst [vmem:[#allocation3 + $0x8] sm:$0xff] %v296
        $region48: #{lstm_forward.4} parent=31 // pred_fallthru
          _
        // Predicated region
        $region49: #{lstm_forward.4} parent=31 // pred_check
          %p299 = pneg %p285
        $region50: #{lstm_forward.4} parent=31 // pred_check_branch
          %301 = sbr.rel (%p299) target = $region52
        $region51: #{lstm_forward.4} parent=31 // pred_region
          $region53: #{lstm_forward.4} parent=51
            #allocation16 [shape = 's32[1]{0}', space=sflag, size = 0x4, scoped, tag = 'scoped memory for lstm_forward.4']
            %s302 = smul.u32 %s31, 16
            %s303 = smul.addr %s302, 64
            %s304 = scalar_lea.hbm %s1, %s303
            %s305 = smul.u32 %s31, 8
            %s306 = smul.addr %s305, 8
            %s307 = scalar_lea.vmem [#allocation5], %s306
            // Predicated region
            $region54: #{lstm_forward.4} parent=53 // pred_check
              _
            $region55: #{lstm_forward.4} parent=53 // pred_check_branch
              %309 = sbr.rel target = $region57
            $region56: #{lstm_forward.4} parent=53 // pred_region
              %310 = sst [smem:[#allocation19]] [#allocation18]
              %311 = sst [smem:[#allocation20]] [#allocation17]
            $region57: #{lstm_forward.4} parent=53 // pred_fallthru
              _
            %313 = shalt.err (0)
            %s315 = sshll.u32 %s307, 4
            %s316 = int_to_ptr.vmem [resolvable:$true] %s315
            %318 = dma.hbm_to_vmem [thread:$0]  %s304, 1024, %s316, [#allocation16]
            %s319 = smul.u32 4, 16
            %s320 = smul.u32 %s319, 1
            %s321 = sshll.u32 %s320, 4
            %322 = dma.done [#allocation16], %s321
        $region52: #{lstm_forward.4} parent=31 // pred_fallthru
          _
        %s323 = smul.u32 %s31, 8
        %s324 = smul.addr %s323, 8
        %s325 = scalar_lea.vmem [#allocation5], %s324
        %v326 = vld [vmem:[%s325] sm:$0xff]
        %v327 = vld [vmem:[%s325 + $0x8] sm:$0xff]
        %v328 = vld [vmem:[%s325 + $0x10] sm:$0xff]
        %v329 = vld [vmem:[%s325 + $0x18] sm:$0xff]
        %v330 = vld [vmem:[%s325 + $0x20] sm:$0xff]
        %v331 = vld [vmem:[%s325 + $0x28] sm:$0xff]
        %v332 = vld [vmem:[%s325 + $0x30] sm:$0xff]
        %v333 = vld [vmem:[%s325 + $0x38] sm:$0xff]
        %v334 = vld [vmem:[%s249] sm:$0xf]
        %v335 = vld [vmem:[%s249 + $0x4] sm:$0xf]
        %v336 = vunpack.c.l.bf16 %v334
        %v337 = vunpack.c.l.bf16 %v335
        %v338 = vld [vmem:[#allocation2] sm:$0xff]
        %v339 = vld [vmem:[#allocation2 + $0x8] sm:$0xff]
        %v340 = vpack.c.bf16 %v339, %v338
        %341 = vmatprep.subr.bf16.mxu0 0
        %342 = vmatpush1.bf16.msra.mxu0 %v326
        %343 = vmatprep.subr.bf16.mxu0 0
        %344 = vmatpush1.bf16.msra.mxu0 %v327
        %345 = vmatprep.subr.bf16.mxu0 0
        %346 = vmatpush1.bf16.msra.mxu0 %v328
        %347 = vmatprep.subr.bf16.mxu0 0
        %348 = vmatpush1.bf16.msra.mxu0 %v329
        %349 = vmatprep.subr.bf16.mxu0 0
        %350 = vmatpush1.bf16.msra.mxu0 %v330
        %351 = vmatprep.subr.bf16.mxu0 0
        %352 = vmatpush1.bf16.msra.mxu0 %v331
        %353 = vmatprep.subr.bf16.mxu0 0
        %354 = vmatpush1.bf16.msra.mxu0 %v332
        %355 = vmatprep.subr.bf16.mxu0 0
        %356 = vmatpush1.bf16.msra.mxu0 %v333
        %357 = vmatprep.subr.bf16.mxu0 0
        %358 = vmatpush1.bf16.msra.mxu0 0
        %359 = vmatprep.subr.bf16.mxu0 0
        %360 = vmatpush1.bf16.msra.mxu0 0
        %361 = vmatprep.subr.bf16.mxu0 0
        %362 = vmatpush1.bf16.msra.mxu0 0
        %363 = vmatprep.subr.bf16.mxu0 0
        %364 = vmatpush1.bf16.msra.mxu0 0
        %365 = vmatprep.subr.bf16.mxu0 0
        %366 = vmatpush1.bf16.msra.mxu0 0
        %367 = vmatprep.subr.bf16.mxu0 0
        %368 = vmatpush1.bf16.msra.mxu0 0
        %369 = vmatprep.subr.bf16.mxu0 0
        %370 = vmatpush1.bf16.msra.mxu0 0
        %371 = vmatprep.subr.bf16.mxu0 0
        %372 = vmatpush1.bf16.msra.mxu0 0
        %373 = vmatprep.mubr.bf16.mxu0 0
        %374 = vmatmul.mubr.bf16.gmra.mrb[0].mxu0 %v340
        %v375 = vpop.f32.mrb[0].mxu0
        %v376 = vadd.f32 0.0, %v375
        %v377 = vpop.f32.mrb[0].mxu0
        %v378 = vpop.f32.mrb[0].mxu0
        %v379 = vadd.f32 0.0, %v378
        %v380 = vpop.f32.mrb[0].mxu0
        %381 = vdwg.mxu0
        %v382 = vadd.f32 %v336, %v376
        %v383 = vadd.f32 %v337, %v379
        %s384 = smul.u32 %s31, 16
        %s385 = scalar_lea.vmem [#allocation4], %s384
        %386 = vst [vmem:[%s385] sm:$0xff] %v382
        %387 = vst [vmem:[%s385 + $0x8] sm:$0xff] %v383
        %p388 = scmp.eq.s32.totalorder %s31, 3
        // Predicated region
        $region58: #{lstm_forward.4} parent=31 // pred_check
          %p389 = pneg %p388
        $region59: #{lstm_forward.4} parent=31 // pred_check_branch
          %391 = sbr.rel (%p389) target = $region61
        $region60: #{lstm_forward.4} parent=31 // pred_region
          %v392 = vld [vmem:[#allocation4] sm:$0xff]
          %v393 = vld [vmem:[#allocation4 + $0x8] sm:$0xff]
          %v394 = vxor.u32 %v392, 2147483648
          %v395 = vxor.u32 %v393, 2147483648
          %v396 = vmul.f32 %v394, 1.442695
          %v397 = vpow.pop %v396
          %v398 = vmul.f32 %v395, 1.442695
          %v399 = vpow.pop %v398
          %v400 = vadd.f32 %v397, 1.0
          %v401 = vadd.f32 %v399, 1.0
          %v402 = vrcp.pop %v400
          %v403 = vmul.f32 1.0, %v402
          %v404 = vrcp.pop %v401
          %v405 = vmul.f32 1.0, %v404
          %s406 = scalar_lea.vmem [#allocation4], 16
          %v407 = vld [vmem:[%s406] sm:$0xff]
          %v408 = vld [vmem:[%s406 + $0x8] sm:$0xff]
          %v409 = vxor.u32 %v407, 2147483648
          %v410 = vxor.u32 %v408, 2147483648
          %v411 = vmul.f32 %v409, 1.442695
          %v412 = vpow.pop %v411
          %v413 = vmul.f32 %v410, 1.442695
          %v414 = vpow.pop %v413
          %v415 = vadd.f32 %v412, 1.0
          %v416 = vadd.f32 %v414, 1.0
          %v417 = vrcp.pop %v415
          %v418 = vmul.f32 1.0, %v417
          %v419 = vrcp.pop %v416
          %v420 = vmul.f32 1.0, %v419
          %s421 = scalar_lea.vmem [#allocation4], 32
          %v422 = vld [vmem:[%s421] sm:$0xff]
          %v423 = vld [vmem:[%s421 + $0x8] sm:$0xff]
          %v424 = vtanh.pop %v422
          %v425 = vtanh.pop %v423
          %s426 = scalar_lea.vmem [#allocation4], 48
          %v427 = vld [vmem:[%s426] sm:$0xff]
          %v428 = vld [vmem:[%s426 + $0x8] sm:$0xff]
          %v429 = vxor.u32 %v427, 2147483648
          %v430 = vxor.u32 %v428, 2147483648
          %v431 = vmul.f32 %v429, 1.442695
          %v432 = vpow.pop %v431
          %v433 = vmul.f32 %v430, 1.442695
          %v434 = vpow.pop %v433
          %v435 = vadd.f32 %v432, 1.0
          %v436 = vadd.f32 %v434, 1.0
          %v437 = vrcp.pop %v435
          %v438 = vmul.f32 1.0, %v437
          %v439 = vrcp.pop %v436
          %v440 = vmul.f32 1.0, %v439
          %v441 = vld [vmem:[#allocation3] sm:$0xff]
          %v442 = vld [vmem:[#allocation3 + $0x8] sm:$0xff]
          %v443 = vmul.f32 %v418, %v441
          %v444 = vmul.f32 %v420, %v442
          %v445 = vmul.f32 %v403, %v424
          %v446 = vmul.f32 %v405, %v425
          %v447 = vadd.f32 %v443, %v445
          %v448 = vadd.f32 %v444, %v446
          %v449 = vtanh.pop %v447
          %v450 = vtanh.pop %v448
          %v451 = vmul.f32 %v438, %v449
          %v452 = vmul.f32 %v440, %v450
          %453 = vst [vmem:[#allocation3] sm:$0xff] %v447
          %454 = vst [vmem:[#allocation3 + $0x8] sm:$0xff] %v448
          %455 = vst [vmem:[#allocation2] sm:$0xff] %v451
          %456 = vst [vmem:[#allocation2 + $0x8] sm:$0xff] %v452
          %457 = vst [vmem:[%s279] sm:$0xff] %v451
          %458 = vst [vmem:[%s279 + $0x8] sm:$0xff] %v452
        $region61: #{lstm_forward.4} parent=31 // pred_fallthru
          _
        %p459 = scmp.eq.s32.totalorder %s30, 15
        %p460 = pnand %p459, %p388
        %p461 = pneg %p460
        // Predicated region
        $region62: #{lstm_forward.4} parent=31 // pred_check
          _
        $region63: #{lstm_forward.4} parent=31 // pred_check_branch
          %463 = sbr.rel (%p460) target = $region65
        $region64: #{lstm_forward.4} parent=31 // pred_region
          %v464 = vld [vmem:[#allocation2] sm:$0xff]
          %v465 = vld [vmem:[#allocation2 + $0x8] sm:$0xff]
          %466 = vst [vmem:[#allocation13] sm:$0xff] %v464
          %467 = vst [vmem:[#allocation13 + $0x8] sm:$0xff] %v465
          %v468 = vld [vmem:[#allocation3] sm:$0xff]
          %v469 = vld [vmem:[#allocation3 + $0x8] sm:$0xff]
          %470 = vst [vmem:[#allocation15] sm:$0xff] %v468
          %471 = vst [vmem:[#allocation15 + $0x8] sm:$0xff] %v469
        $region65: #{lstm_forward.4} parent=31 // pred_fallthru
          _
        %s472 = sand.u32 %s116, 1
        %s473 = scalar_lea.sflag [#allocation8], %s472
        %s474 = sand.u32 %s116, 1
        %s475 = smul.addr %s474, 16
        %s476 = scalar_lea.vmem [#allocation12], %s475
        // Predicated region
        $region66: #{lstm_forward.4} parent=31 // pred_check
          %p477 = pneg %p126
        $region67: #{lstm_forward.4} parent=31 // pred_check_branch
          %479 = sbr.rel (%p477) target = $region69
        $region68: #{lstm_forward.4} parent=31 // pred_region
          %s481 = ssub.s32 256, 256
          %482 = vsyncadd %s473, %s481
          %s483 = smul.addr %s30, 2
          %s484 = smul.addr %s483, 128
          %s485 = scalar_lea.hbm %s4, %s484
          %s486 = sshll.u32 %s476, 4
          %s487 = int_to_ptr.vmem [resolvable:$true] %s486
          %492 = dma.vmem_to_hbm [thread:$0]  %s487, 256, %s485, %s473, 128, 128, 8
        $region69: #{lstm_forward.4} parent=31 // pred_fallthru
          _
        // Predicated region
        $region70: #{lstm_forward.4} parent=31 // pred_check
          %p493 = pneg %p147
        $region71: #{lstm_forward.4} parent=31 // pred_check_branch
          %495 = sbr.rel (%p493) target = $region73
        $region72: #{lstm_forward.4} parent=31 // pred_region
          %s497 = ssub.s32 256, 256
          %498 = vsyncadd [#allocation14], %s497
          %s499 = sshll.u32 [#allocation13], 4
          %s500 = int_to_ptr.vmem [resolvable:$true] %s499
          %505 = dma.vmem_to_hbm [thread:$0]  %s500, 256, %s5, [#allocation14], 128, 128, 8
        $region73: #{lstm_forward.4} parent=31 // pred_fallthru
          _
        // Predicated region
        $region74: #{lstm_forward.4} parent=31 // pred_check
          %p506 = pneg %p168
        $region75: #{lstm_forward.4} parent=31 // pred_check_branch
          %508 = sbr.rel (%p506) target = $region77
        $region76: #{lstm_forward.4} parent=31 // pred_region
          %s510 = ssub.s32 256, 256
          %511 = vsyncadd [#allocation14], %s510
          %s512 = sshll.u32 [#allocation15], 4
          %s513 = int_to_ptr.vmem [resolvable:$true] %s512
          %518 = dma.vmem_to_hbm [thread:$0]  %s513, 256, %s6, [#allocation14], 128, 128, 8
        $region77: #{lstm_forward.4} parent=31 // pred_fallthru
          _
        // Predicated region
        $region78: #{lstm_forward.4} parent=31 // pred_check
          %p519 = pneg %p147
        $region79: #{lstm_forward.4} parent=31 // pred_check_branch
          %521 = sbr.rel (%p519) target = $region81
        $region80: #{lstm_forward.4} parent=31 // pred_region
          %522 = dma.done [#allocation14], 256
        $region81: #{lstm_forward.4} parent=31 // pred_fallthru
          _
        // Predicated region
        $region82: #{lstm_forward.4} parent=31 // pred_check
          %p523 = pneg %p168
        $region83: #{lstm_forward.4} parent=31 // pred_check_branch
          %525 = sbr.rel (%p523) target = $region85
        $region84: #{lstm_forward.4} parent=31 // pred_region
          %526 = dma.done [#allocation14], 256
        $region85: #{lstm_forward.4} parent=31 // pred_fallthru
          _
      $region32: #{lstm_forward.4} parent=5 // pred_fallthru
        _
      %p527 = scmp.le.s32.totalorder 2, %s21
      // Predicated region
      $region86: #{lstm_forward.4} parent=5 // pred_check
        %p528 = pneg %p527
      $region87: #{lstm_forward.4} parent=5 // pred_check_branch
        %530 = sbr.rel (%p528) target = $region89
      $region88: #{lstm_forward.4} parent=5 // pred_region
        %s531 = ssub.s32 %s21, 2
        // Predicated region
        $region90: #{lstm_forward.4} parent=88 // pred_check
          %p532 = pneg %p132
        $region91: #{lstm_forward.4} parent=88 // pred_check_branch
          %534 = sbr.rel (%p532) target = $region93
        $region92: #{lstm_forward.4} parent=88 // pred_region
          %s535 = sand.u32 %s117, 1
          %s536 = scalar_lea.sflag [#allocation8], %s535
          %s537 = sand.u32 %s117, 1
          %s538 = smul.addr %s537, 16
          %s539 = scalar_lea.vmem [#allocation12], %s538
          %540 = dma.done %s536, 256
        $region93: #{lstm_forward.4} parent=88 // pred_fallthru
          _
      $region89: #{lstm_forward.4} parent=5 // pred_fallthru
        _
    $region6: #{lstm_forward.4} parent=1 // loop_footer
      %s25 = sadd.s32 1, %s21
    $region7: #{lstm_forward.4} parent=1 // loop_footer_branch
      %20 = sbr.rel target = $region3
    $region8: #{lstm_forward.4} parent=1 // loop_exit
      _
    %541 = vsyncpa [#allocation7], 1
    %s542 = scalar_lea.sflag [#allocation7], 1
    %543 = vsyncpa %s542, 1
    %544 = vsyncpa [#allocation10], 1
    %545 = vsyncpa [#allocation8], 1
    %s546 = scalar_lea.sflag [#allocation8], 1
    %547 = vsyncpa %s546, 1
    %548 = vsyncpa [#allocation14], 1

// kernel: lstm_forward.3
$region0: #{lstm_forward.3}
  #allocation0 [shape = 'u32[]', space=smem, size = 0x4, offset = 0x4, fixed_abs, tag = 'smem constant byte address 0x4 - core index']
  #allocation1 [shape = 'u32[144,128]{1,0:T(1,128)}', space=vmem, size = 0x12000, scoped, tag = 'internal scratch']
  %s0 = inlined_call_operand.hbm [shape: bf16[256,256], index: 0, kind: input, shape index: {}]
  %s1 = inlined_call_operand.hbm [shape: bf16[256,512], index: 1, kind: input, shape index: {}]
  %s2 = inlined_call_operand.hbm [shape: f32[1,512], index: 2, kind: input, shape index: {}]
  %s3 = inlined_call_operand.hbm [shape: bf16[256,512], index: 3, kind: output, shape index: {}]
  %s4 = sld [smem:[#allocation0]]
  $region34: #{lstm_forward.3} parent=0
    _
  %s6 = ssub.s32 1, %s4
  %s7 = scalar_select 0, %s6, %s4
  $region1: #{lstm_forward.3} parent=0
    #allocation2 [shape = 'u8[131072]{0}', space=vmem, size = 0x20000, scoped, tag = 'input window, operand 0, single buffered']
    #allocation3 [shape = 's32[1]{0}', space=sflag, size = 0x4, scoped, tag = 'scoped memory for lstm_forward.3']
    #allocation4 [shape = 's32[1]{0}', space=sflag, size = 0x4, scoped, tag = 'scoped memory for lstm_forward.3']
    #allocation5 [shape = 'u8[262144]{0}', space=vmem, size = 0x40000, scoped, tag = 'input window, operand 1, single buffered']
    #allocation6 [shape = 's32[1]{0}', space=sflag, size = 0x4, scoped, tag = 'scoped memory for lstm_forward.3']
    #allocation7 [shape = 'u8[2048]{0}', space=vmem, size = 0x800, scoped, tag = 'input window, operand 2, single buffered']
    #allocation8 [shape = 'u8[262144]{0}', space=vmem, size = 0x40000, scoped, tag = 'output window, operand 0, single buffered']
    %8 = vsyncpa [#allocation3], 0
    %9 = vsyncpa [#allocation6], 0
    %10 = vsyncpa [#allocation4], 0
    // Predicated region
    $region2: #{lstm_forward.3} parent=1 // pred_check
      _
    $region3: #{lstm_forward.3} parent=1 // pred_check_branch
      %12 = sbr.rel (0) target = $region5
    $region4: #{lstm_forward.3} parent=1 // pred_region
      %s14 = ssub.s32 4096, 4096
      %15 = vsyncadd [#allocation3], %s14
      %s16 = sshll.u32 [#allocation2], 4
      %s17 = int_to_ptr.vmem [resolvable:$true] %s16
      %22 = dma.hbm_to_vmem [thread:$0]  %s0, 4096, %s17, [#allocation3], 128, 128, 8
    $region5: #{lstm_forward.3} parent=1 // pred_fallthru
      _
    // Predicated region
    $region6: #{lstm_forward.3} parent=1 // pred_check
      _
    $region7: #{lstm_forward.3} parent=1 // pred_check_branch
      %24 = sbr.rel (0) target = $region9
    $region8: #{lstm_forward.3} parent=1 // pred_region
      %s26 = ssub.s32 8192, 8192
      %27 = vsyncadd [#allocation6], %s26
      %s28 = sshll.u32 [#allocation5], 4
      %s29 = int_to_ptr.vmem [resolvable:$true] %s28
      %34 = dma.hbm_to_vmem [thread:$0]  %s1, 8192, %s29, [#allocation6], 256, 256, 16
    $region9: #{lstm_forward.3} parent=1 // pred_fallthru
      _
    // Predicated region
    $region10: #{lstm_forward.3} parent=1 // pred_check
      _
    $region11: #{lstm_forward.3} parent=1 // pred_check_branch
      %36 = sbr.rel (0) target = $region13
    $region12: #{lstm_forward.3} parent=1 // pred_region
      %s38 = ssub.s32 64, 64
      %39 = vsyncadd [#allocation6], %s38
      %s41 = sshll.u32 [#allocation7], 4
      %s42 = int_to_ptr.vmem [resolvable:$true] %s41
      %44 = dma.hbm_to_vmem [thread:$0]  %s2, 64, %s42, [#allocation6]
    $region13: #{lstm_forward.3} parent=1 // pred_fallthru
      _
    // Predicated region
    $region14: #{lstm_forward.3} parent=1 // pred_check
      _
    $region15: #{lstm_forward.3} parent=1 // pred_check_branch
      %46 = sbr.rel (0) target = $region17
    $region16: #{lstm_forward.3} parent=1 // pred_region
      %47 = dma.done [#allocation3], 4096
    $region17: #{lstm_forward.3} parent=1 // pred_fallthru
      _
    // Predicated region
    $region18: #{lstm_forward.3} parent=1 // pred_check
      _
    $region19: #{lstm_forward.3} parent=1 // pred_check_branch
      %49 = sbr.rel (0) target = $region21
    $region20: #{lstm_forward.3} parent=1 // pred_region
      %50 = dma.done [#allocation6], 8192
    $region21: #{lstm_forward.3} parent=1 // pred_fallthru
      _
    // Predicated region
    $region22: #{lstm_forward.3} parent=1 // pred_check
      _
    $region23: #{lstm_forward.3} parent=1 // pred_check_branch
      %52 = sbr.rel (0) target = $region25
    $region24: #{lstm_forward.3} parent=1 // pred_region
      %53 = dma.done [#allocation6], 64
    $region25: #{lstm_forward.3} parent=1 // pred_fallthru
      _
    %v54 = vld [vmem:[#allocation2] sm:$0xff]
    %v55 = vld [vmem:[#allocation2 + $0x8] sm:$0xff]
    %v56 = vld [vmem:[#allocation2 + $0x10] sm:$0xff]
    %v57 = vld [vmem:[#allocation2 + $0x18] sm:$0xff]
    %v58 = vld [vmem:[#allocation2 + $0x20] sm:$0xff]
    %v59 = vld [vmem:[#allocation2 + $0x28] sm:$0xff]
    %v60 = vld [vmem:[#allocation2 + $0x30] sm:$0xff]
    %v61 = vld [vmem:[#allocation2 + $0x38] sm:$0xff]
    %v62 = vld [vmem:[#allocation2 + $0x40] sm:$0xff]
    %v63 = vld [vmem:[#allocation2 + $0x48] sm:$0xff]
    %v64 = vld [vmem:[#allocation2 + $0x50] sm:$0xff]
    %v65 = vld [vmem:[#allocation2 + $0x58] sm:$0xff]
    %v66 = vld [vmem:[#allocation2 + $0x60] sm:$0xff]
    %v67 = vld [vmem:[#allocation2 + $0x68] sm:$0xff]
    %v68 = vld [vmem:[#allocation2 + $0x70] sm:$0xff]
    %v69 = vld [vmem:[#allocation2 + $0x78] sm:$0xff]
    %v70 = vld [vmem:[#allocation2 + $0x80] sm:$0xff]
    %v71 = vld [vmem:[#allocation2 + $0x88] sm:$0xff]
    %v72 = vld [vmem:[#allocation2 + $0x90] sm:$0xff]
    %v73 = vld [vmem:[#allocation2 + $0x98] sm:$0xff]
    %v74 = vld [vmem:[#allocation2 + $0xa0] sm:$0xff]
    %v75 = vld [vmem:[#allocation2 + $0xa8] sm:$0xff]
    %v76 = vld [vmem:[#allocation2 + $0xb0] sm:$0xff]
    %v77 = vld [vmem:[#allocation2 + $0xb8] sm:$0xff]
    %v78 = vld [vmem:[#allocation2 + $0xc0] sm:$0xff]
    %v79 = vld [vmem:[#allocation2 + $0xc8] sm:$0xff]
    %v80 = vld [vmem:[#allocation2 + $0xd0] sm:$0xff]
    %v81 = vld [vmem:[#allocation2 + $0xd8] sm:$0xff]
    %v82 = vld [vmem:[#allocation2 + $0xe0] sm:$0xff]
    %v83 = vld [vmem:[#allocation2 + $0xe8] sm:$0xff]
    %v84 = vld [vmem:[#allocation2 + $0xf0] sm:$0xff]
    %v85 = vld [vmem:[#allocation2 + $0xf8] sm:$0xff]
    %v86 = vld [vmem:[#allocation5] sm:$0xff]
    %v87 = vld [vmem:[#allocation5 + $0x8] sm:$0xff]
    %v88 = vld [vmem:[#allocation5 + $0x10] sm:$0xff]
    %v89 = vld [vmem:[#allocation5 + $0x18] sm:$0xff]
    %v90 = vld [vmem:[#allocation5 + $0x20] sm:$0xff]
    %v91 = vld [vmem:[#allocation5 + $0x28] sm:$0xff]
    %v92 = vld [vmem:[#allocation5 + $0x30] sm:$0xff]
    %v93 = vld [vmem:[#allocation5 + $0x38] sm:$0xff]
    %v94 = vld [vmem:[#allocation5 + $0x40] sm:$0xff]
    %v95 = vld [vmem:[#allocation5 + $0x48] sm:$0xff]
    %v96 = vld [vmem:[#allocation5 + $0x50] sm:$0xff]
    %v97 = vld [vmem:[#allocation5 + $0x58] sm:$0xff]
    %v98 = vld [vmem:[#allocation5 + $0x60] sm:$0xff]
    %v99 = vld [vmem:[#allocation5 + $0x68] sm:$0xff]
    %v100 = vld [vmem:[#allocation5 + $0x70] sm:$0xff]
    %v101 = vld [vmem:[#allocation5 + $0x78] sm:$0xff]
    %v102 = vld [vmem:[#allocation5 + $0x80] sm:$0xff]
    %v103 = vld [vmem:[#allocation5 + $0x88] sm:$0xff]
    %v104 = vld [vmem:[#allocation5 + $0x90] sm:$0xff]
    %v105 = vld [vmem:[#allocation5 + $0x98] sm:$0xff]
    %v106 = vld [vmem:[#allocation5 + $0xa0] sm:$0xff]
    %v107 = vld [vmem:[#allocation5 + $0xa8] sm:$0xff]
    %v108 = vld [vmem:[#allocation5 + $0xb0] sm:$0xff]
    %v109 = vld [vmem:[#allocation5 + $0xb8] sm:$0xff]
    %v110 = vld [vmem:[#allocation5 + $0xc0] sm:$0xff]
    %v111 = vld [vmem:[#allocation5 + $0xc8] sm:$0xff]
    %v112 = vld [vmem:[#allocation5 + $0xd0] sm:$0xff]
    %v113 = vld [vmem:[#allocation5 + $0xd8] sm:$0xff]
    %v114 = vld [vmem:[#allocation5 + $0xe0] sm:$0xff]
    %v115 = vld [vmem:[#allocation5 + $0xe8] sm:$0xff]
    %v116 = vld [vmem:[#allocation5 + $0xf0] sm:$0xff]
    %v117 = vld [vmem:[#allocation5 + $0xf8] sm:$0xff]
    %v118 = vld [vmem:[#allocation5 + $0x100] sm:$0xff]
    %v119 = vld [vmem:[#allocation5 + $0x108] sm:$0xff]
    %v120 = vld [vmem:[#allocation5 + $0x110] sm:$0xff]
    %v121 = vld [vmem:[#allocation5 + $0x118] sm:$0xff]
    %v122 = vld [vmem:[#allocation5 + $0x120] sm:$0xff]
    %v123 = vld [vmem:[#allocation5 + $0x128] sm:$0xff]
    %v124 = vld [vmem:[#allocation5 + $0x130] sm:$0xff]
    %v125 = vld [vmem:[#allocation5 + $0x138] sm:$0xff]
    %v126 = vld [vmem:[#allocation5 + $0x140] sm:$0xff]
    %v127 = vld [vmem:[#allocation5 + $0x148] sm:$0xff]
    %v128 = vld [vmem:[#allocation5 + $0x150] sm:$0xff]
    %v129 = vld [vmem:[#allocation5 + $0x158] sm:$0xff]
    %v130 = vld [vmem:[#allocation5 + $0x160] sm:$0xff]
    %v131 = vld [vmem:[#allocation5 + $0x168] sm:$0xff]
    %v132 = vld [vmem:[#allocation5 + $0x170] sm:$0xff]
    %v133 = vld [vmem:[#allocation5 + $0x178] sm:$0xff]
    %v134 = vld [vmem:[#allocation5 + $0x180] sm:$0xff]
    %v135 = vld [vmem:[#allocation5 + $0x188] sm:$0xff]
    %v136 = vld [vmem:[#allocation5 + $0x190] sm:$0xff]
    %v137 = vld [vmem:[#allocation5 + $0x198] sm:$0xff]
    %v138 = vld [vmem:[#allocation5 + $0x1a0] sm:$0xff]
    %v139 = vld [vmem:[#allocation5 + $0x1a8] sm:$0xff]
    %v140 = vld [vmem:[#allocation5 + $0x1b0] sm:$0xff]
    %v141 = vld [vmem:[#allocation5 + $0x1b8] sm:$0xff]
    %v142 = vld [vmem:[#allocation5 + $0x1c0] sm:$0xff]
    %v143 = vld [vmem:[#allocation5 + $0x1c8] sm:$0xff]
    %v144 = vld [vmem:[#allocation5 + $0x1d0] sm:$0xff]
    %v145 = vld [vmem:[#allocation5 + $0x1d8] sm:$0xff]
    %v146 = vld [vmem:[#allocation5 + $0x1e0] sm:$0xff]
    %v147 = vld [vmem:[#allocation5 + $0x1e8] sm:$0xff]
    %v148 = vld [vmem:[#allocation5 + $0x1f0] sm:$0xff]
    %v149 = vld [vmem:[#allocation5 + $0x1f8] sm:$0xff]
    %v150 = vld [vmem:[#allocation7] sm:$0xf]
    %v152 = vlaneseq
    %v153 = vshrl.u32 %v152, 7
    %v154 = vsub.s32 0, %v153
    %v155 = vrot.slane %v150, %v154
    %v156 = vlaneseq
    %v157 = vshrl.u32 %v156, 7
    %v158 = vsub.s32 1, %v157
    %v159 = vrot.slane %v150, %v158
    %v160 = vlaneseq
    %v161 = vshrl.u32 %v160, 7
    %v162 = vsub.s32 2, %v161
    %v163 = vrot.slane %v150, %v162
    %v164 = vlaneseq
    %v165 = vshrl.u32 %v164, 7
    %v166 = vsub.s32 3, %v165
    %v167 = vrot.slane %v150, %v166
    %v204 = vunpack.c.l.b16 %v54
    %v205 = vunpack.c.h.b16 %v54
    %v206 = vunpack.c.l.b16 %v55
    %v207 = vunpack.c.h.b16 %v55
    %v208 = vunpack.c.l.b16 %v56
    %v209 = vunpack.c.h.b16 %v56
    %v210 = vunpack.c.l.b16 %v57
    %v211 = vunpack.c.h.b16 %v57
    %v212 = vunpack.c.l.b16 %v58
    %v213 = vunpack.c.h.b16 %v58
    %v214 = vunpack.c.l.b16 %v59
    %v215 = vunpack.c.h.b16 %v59
    %v216 = vunpack.c.l.b16 %v60
    %v217 = vunpack.c.h.b16 %v60
    %v218 = vunpack.c.l.b16 %v61
    %v219 = vunpack.c.h.b16 %v61
    %v220 = vunpack.c.l.b16 %v62
    %v221 = vunpack.c.h.b16 %v62
    %v222 = vunpack.c.l.b16 %v63
    %v223 = vunpack.c.h.b16 %v63
    %v224 = vunpack.c.l.b16 %v64
    %v225 = vunpack.c.h.b16 %v64
    %v226 = vunpack.c.l.b16 %v65
    %v227 = vunpack.c.h.b16 %v65
    %v228 = vunpack.c.l.b16 %v66
    %v229 = vunpack.c.h.b16 %v66
    %v230 = vunpack.c.l.b16 %v67
    %v231 = vunpack.c.h.b16 %v67
    %v232 = vunpack.c.l.b16 %v68
    %v233 = vunpack.c.h.b16 %v68
    %v234 = vunpack.c.l.b16 %v69
    %v235 = vunpack.c.h.b16 %v69
    %v236 = vunpack.c.l.b16 %v70
    %v237 = vunpack.c.h.b16 %v70
    %v238 = vunpack.c.l.b16 %v71
    %v239 = vunpack.c.h.b16 %v71
    %v240 = vunpack.c.l.b16 %v72
    %v241 = vunpack.c.h.b16 %v72
    %v242 = vunpack.c.l.b16 %v73
    %v243 = vunpack.c.h.b16 %v73
    %v244 = vunpack.c.l.b16 %v74
    %v245 = vunpack.c.h.b16 %v74
    %v246 = vunpack.c.l.b16 %v75
    %v247 = vunpack.c.h.b16 %v75
    %v248 = vunpack.c.l.b16 %v76
    %v249 = vunpack.c.h.b16 %v76
    %v250 = vunpack.c.l.b16 %v77
    %v251 = vunpack.c.h.b16 %v77
    %v252 = vunpack.c.l.b16 %v78
    %v253 = vunpack.c.h.b16 %v78
    %v254 = vunpack.c.l.b16 %v79
    %v255 = vunpack.c.h.b16 %v79
    %v256 = vunpack.c.l.b16 %v80
    %v257 = vunpack.c.h.b16 %v80
    %v258 = vunpack.c.l.b16 %v81
    %v259 = vunpack.c.h.b16 %v81
    %v260 = vunpack.c.l.b16 %v82
    %v261 = vunpack.c.h.b16 %v82
    %v262 = vunpack.c.l.b16 %v83
    %v263 = vunpack.c.h.b16 %v83
    %v264 = vunpack.c.l.b16 %v84
    %v265 = vunpack.c.h.b16 %v84
    %v266 = vunpack.c.l.b16 %v85
    %v267 = vunpack.c.h.b16 %v85
    %v268 = vpack.c.b16 %v206, %v204
    %v269 = vpack.c.b16 %v207, %v205
    %v270 = vpack.c.b16 %v210, %v208
    %v271 = vpack.c.b16 %v211, %v209
    %v272 = vpack.c.b16 %v214, %v212
    %v273 = vpack.c.b16 %v215, %v213
    %v274 = vpack.c.b16 %v218, %v216
    %v275 = vpack.c.b16 %v219, %v217
    %v276 = vpack.c.b16 %v222, %v220
    %v277 = vpack.c.b16 %v223, %v221
    %v278 = vpack.c.b16 %v226, %v224
    %v279 = vpack.c.b16 %v227, %v225
    %v280 = vpack.c.b16 %v230, %v228
    %v281 = vpack.c.b16 %v231, %v229
    %v282 = vpack.c.b16 %v234, %v232
    %v283 = vpack.c.b16 %v235, %v233
    %v284 = vpack.c.b16 %v238, %v236
    %v285 = vpack.c.b16 %v239, %v237
    %v286 = vpack.c.b16 %v242, %v240
    %v287 = vpack.c.b16 %v243, %v241
    %v288 = vpack.c.b16 %v246, %v244
    %v289 = vpack.c.b16 %v247, %v245
    %v290 = vpack.c.b16 %v250, %v248
    %v291 = vpack.c.b16 %v251, %v249
    %v292 = vpack.c.b16 %v254, %v252
    %v293 = vpack.c.b16 %v255, %v253
    %v294 = vpack.c.b16 %v258, %v256
    %v295 = vpack.c.b16 %v259, %v257
    %v296 = vpack.c.b16 %v262, %v260
    %v297 = vpack.c.b16 %v263, %v261
    %v298 = vpack.c.b16 %v266, %v264
    %v299 = vpack.c.b16 %v267, %v265
    %v396 = vunpack.c.l.b16 %v86
    %v397 = vunpack.c.h.b16 %v86
    %v398 = vunpack.c.l.b16 %v87
    %v399 = vunpack.c.h.b16 %v87
    %v400 = vunpack.c.l.b16 %v88
    %v401 = vunpack.c.h.b16 %v88
    %v402 = vunpack.c.l.b16 %v89
    %v403 = vunpack.c.h.b16 %v89
    %v404 = vunpack.c.l.b16 %v90
    %v405 = vunpack.c.h.b16 %v90
    %v406 = vunpack.c.l.b16 %v91
    %v407 = vunpack.c.h.b16 %v91
    %v408 = vunpack.c.l.b16 %v92
    %v409 = vunpack.c.h.b16 %v92
    %v410 = vunpack.c.l.b16 %v93
    %v411 = vunpack.c.h.b16 %v93
    %v412 = vunpack.c.l.b16 %v94
    %v413 = vunpack.c.h.b16 %v94
    %v414 = vunpack.c.l.b16 %v95
    %v415 = vunpack.c.h.b16 %v95
    %v416 = vunpack.c.l.b16 %v96
    %v417 = vunpack.c.h.b16 %v96
    %v418 = vunpack.c.l.b16 %v97
    %v419 = vunpack.c.h.b16 %v97
    %v420 = vunpack.c.l.b16 %v98
    %v421 = vunpack.c.h.b16 %v98
    %v422 = vunpack.c.l.b16 %v99
    %v423 = vunpack.c.h.b16 %v99
    %v424 = vunpack.c.l.b16 %v100
    %v425 = vunpack.c.h.b16 %v100
    %v426 = vunpack.c.l.b16 %v101
    %v427 = vunpack.c.h.b16 %v101
    %v428 = vunpack.c.l.b16 %v102
    %v429 = vunpack.c.h.b16 %v102
    %v430 = vunpack.c.l.b16 %v103
    %v431 = vunpack.c.h.b16 %v103
    %v432 = vunpack.c.l.b16 %v104
    %v433 = vunpack.c.h.b16 %v104
    %v434 = vunpack.c.l.b16 %v105
    %v435 = vunpack.c.h.b16 %v105
    %v436 = vunpack.c.l.b16 %v106
    %v437 = vunpack.c.h.b16 %v106
    %v438 = vunpack.c.l.b16 %v107
    %v439 = vunpack.c.h.b16 %v107
    %v440 = vunpack.c.l.b16 %v108
    %v441 = vunpack.c.h.b16 %v108
    %v442 = vunpack.c.l.b16 %v109
    %v443 = vunpack.c.h.b16 %v109
    %v444 = vunpack.c.l.b16 %v110
    %v445 = vunpack.c.h.b16 %v110
    %v446 = vunpack.c.l.b16 %v111
    %v447 = vunpack.c.h.b16 %v111
    %v448 = vunpack.c.l.b16 %v112
    %v449 = vunpack.c.h.b16 %v112
    %v450 = vunpack.c.l.b16 %v113
    %v451 = vunpack.c.h.b16 %v113
    %v452 = vunpack.c.l.b16 %v114
    %v453 = vunpack.c.h.b16 %v114
    %v454 = vunpack.c.l.b16 %v115
    %v455 = vunpack.c.h.b16 %v115
    %v456 = vunpack.c.l.b16 %v116
    %v457 = vunpack.c.h.b16 %v116
    %v458 = vunpack.c.l.b16 %v117
    %v459 = vunpack.c.h.b16 %v117
    %v460 = vunpack.c.l.b16 %v118
    %v461 = vunpack.c.h.b16 %v118
    %v462 = vunpack.c.l.b16 %v119
    %v463 = vunpack.c.h.b16 %v119
    %v464 = vunpack.c.l.b16 %v120
    %v465 = vunpack.c.h.b16 %v120
    %v466 = vunpack.c.l.b16 %v121
    %v467 = vunpack.c.h.b16 %v121
    %v468 = vunpack.c.l.b16 %v122
    %v469 = vunpack.c.h.b16 %v122
    %v470 = vunpack.c.l.b16 %v123
    %v471 = vunpack.c.h.b16 %v123
    %v472 = vunpack.c.l.b16 %v124
    %v473 = vunpack.c.h.b16 %v124
    %v474 = vunpack.c.l.b16 %v125
    %v475 = vunpack.c.h.b16 %v125
    %v476 = vunpack.c.l.b16 %v126
    %v477 = vunpack.c.h.b16 %v126
    %v478 = vunpack.c.l.b16 %v127
    %v479 = vunpack.c.h.b16 %v127
    %v480 = vunpack.c.l.b16 %v128
    %v481 = vunpack.c.h.b16 %v128
    %v482 = vunpack.c.l.b16 %v129
    %v483 = vunpack.c.h.b16 %v129
    %v484 = vunpack.c.l.b16 %v130
    %v485 = vunpack.c.h.b16 %v130
    %v486 = vunpack.c.l.b16 %v131
    %v487 = vunpack.c.h.b16 %v131
    %v488 = vunpack.c.l.b16 %v132
    %v489 = vunpack.c.h.b16 %v132
    %v490 = vunpack.c.l.b16 %v133
    %v491 = vunpack.c.h.b16 %v133
    %v492 = vunpack.c.l.b16 %v134
    %v493 = vunpack.c.h.b16 %v134
    %v494 = vunpack.c.l.b16 %v135
    %v495 = vunpack.c.h.b16 %v135
    %v496 = vunpack.c.l.b16 %v136
    %v497 = vunpack.c.h.b16 %v136
    %v498 = vunpack.c.l.b16 %v137
    %v499 = vunpack.c.h.b16 %v137
    %v500 = vunpack.c.l.b16 %v138
    %v501 = vunpack.c.h.b16 %v138
    %v502 = vunpack.c.l.b16 %v139
    %v503 = vunpack.c.h.b16 %v139
    %v504 = vunpack.c.l.b16 %v140
    %v505 = vunpack.c.h.b16 %v140
    %v506 = vunpack.c.l.b16 %v141
    %v507 = vunpack.c.h.b16 %v141
    %v508 = vunpack.c.l.b16 %v142
    %v509 = vunpack.c.h.b16 %v142
    %v510 = vunpack.c.l.b16 %v143
    %v511 = vunpack.c.h.b16 %v143
    %v512 = vunpack.c.l.b16 %v144
    %v513 = vunpack.c.h.b16 %v144
    %v514 = vunpack.c.l.b16 %v145
    %v515 = vunpack.c.h.b16 %v145
    %v516 = vunpack.c.l.b16 %v146
    %v517 = vunpack.c.h.b16 %v146
    %v518 = vunpack.c.l.b16 %v147
    %v519 = vunpack.c.h.b16 %v147
    %v520 = vunpack.c.l.b16 %v148
    %v521 = vunpack.c.h.b16 %v148
    %v522 = vunpack.c.l.b16 %v149
    %v523 = vunpack.c.h.b16 %v149
    %v524 = vpack.c.b16 %v400, %v396
    %v525 = vpack.c.b16 %v401, %v397
    %v526 = vpack.c.b16 %v402, %v398
    %v527 = vpack.c.b16 %v403, %v399
    %v528 = vpack.c.b16 %v408, %v404
    %v529 = vpack.c.b16 %v409, %v405
    %v530 = vpack.c.b16 %v410, %v406
    %v531 = vpack.c.b16 %v411, %v407
    %v532 = vpack.c.b16 %v416, %v412
    %v533 = vpack.c.b16 %v417, %v413
    %v534 = vpack.c.b16 %v418, %v414
    %v535 = vpack.c.b16 %v419, %v415
    %v536 = vpack.c.b16 %v424, %v420
    %v537 = vpack.c.b16 %v425, %v421
    %v538 = vpack.c.b16 %v426, %v422
    %v539 = vpack.c.b16 %v427, %v423
    %v540 = vpack.c.b16 %v432, %v428
    %v541 = vpack.c.b16 %v433, %v429
    %v542 = vpack.c.b16 %v434, %v430
    %v543 = vpack.c.b16 %v435, %v431
    %v544 = vpack.c.b16 %v440, %v436
    %v545 = vpack.c.b16 %v441, %v437
    %v546 = vpack.c.b16 %v442, %v438
    %v547 = vpack.c.b16 %v443, %v439
    %v548 = vpack.c.b16 %v448, %v444
    %v549 = vpack.c.b16 %v449, %v445
    %v550 = vpack.c.b16 %v450, %v446
    %v551 = vpack.c.b16 %v451, %v447
    %v552 = vpack.c.b16 %v456, %v452
    %v553 = vpack.c.b16 %v457, %v453
    %v554 = vpack.c.b16 %v458, %v454
    %v555 = vpack.c.b16 %v459, %v455
    %v556 = vpack.c.b16 %v464, %v460
    %v557 = vpack.c.b16 %v465, %v461
    %v558 = vpack.c.b16 %v466, %v462
    %v559 = vpack.c.b16 %v467, %v463
    %v560 = vpack.c.b16 %v472, %v468
    %v561 = vpack.c.b16 %v473, %v469
    %v562 = vpack.c.b16 %v474, %v470
    %v563 = vpack.c.b16 %v475, %v471
    %v564 = vpack.c.b16 %v480, %v476
    %v565 = vpack.c.b16 %v481, %v477
    %v566 = vpack.c.b16 %v482, %v478
    %v567 = vpack.c.b16 %v483, %v479
    %v568 = vpack.c.b16 %v488, %v484
    %v569 = vpack.c.b16 %v489, %v485
    %v570 = vpack.c.b16 %v490, %v486
    %v571 = vpack.c.b16 %v491, %v487
    %v572 = vpack.c.b16 %v496, %v492
    %v573 = vpack.c.b16 %v497, %v493
    %v574 = vpack.c.b16 %v498, %v494
    %v575 = vpack.c.b16 %v499, %v495
    %v576 = vpack.c.b16 %v504, %v500
    %v577 = vpack.c.b16 %v505, %v501
    %v578 = vpack.c.b16 %v506, %v502
    %v579 = vpack.c.b16 %v507, %v503
    %v580 = vpack.c.b16 %v512, %v508
    %v581 = vpack.c.b16 %v513, %v509
    %v582 = vpack.c.b16 %v514, %v510
    %v583 = vpack.c.b16 %v515, %v511
    %v584 = vpack.c.b16 %v520, %v516
    %v585 = vpack.c.b16 %v521, %v517
    %v586 = vpack.c.b16 %v522, %v518
    %v587 = vpack.c.b16 %v523, %v519
    %652 = vmatprep.subr.bf16.mxu0 %v525
    %653 = vmatpush1.bf16.msra.mxu0 %v524
    %654 = vmatprep.subr.bf16.mxu0 %v529
    %655 = vmatpush1.bf16.msra.mxu0 %v528
    %656 = vmatprep.subr.bf16.mxu0 %v533
    %657 = vmatpush1.bf16.msra.mxu0 %v532
    %658 = vmatprep.subr.bf16.mxu0 %v537
    %659 = vmatpush1.bf16.msra.mxu0 %v536
    %660 = vmatprep.subr.bf16.mxu0 %v541
    %661 = vmatpush1.bf16.msra.mxu0 %v540
    %662 = vmatprep.subr.bf16.mxu0 %v545
    %663 = vmatpush1.bf16.msra.mxu0 %v544
    %664 = vmatprep.subr.bf16.mxu0 %v549
    %665 = vmatpush1.bf16.msra.mxu0 %v548
    %666 = vmatprep.subr.bf16.mxu0 %v553
    %667 = vmatpush1.bf16.msra.mxu0 %v552
    %668 = vmatprep.subr.bf16.mxu0 %v557
    %669 = vmatpush1.bf16.msra.mxu0 %v556
    %670 = vmatprep.subr.bf16.mxu0 %v561
    %671 = vmatpush1.bf16.msra.mxu0 %v560
    %672 = vmatprep.subr.bf16.mxu0 %v565
    %673 = vmatpush1.bf16.msra.mxu0 %v564
    %674 = vmatprep.subr.bf16.mxu0 %v569
    %675 = vmatpush1.bf16.msra.mxu0 %v568
    %676 = vmatprep.subr.bf16.mxu0 %v573
    %677 = vmatpush1.bf16.msra.mxu0 %v572
    %678 = vmatprep.subr.bf16.mxu0 %v577
    %679 = vmatpush1.bf16.msra.mxu0 %v576
    %680 = vmatprep.subr.bf16.mxu0 %v581
    %681 = vmatpush1.bf16.msra.mxu0 %v580
    %682 = vmatprep.subr.bf16.mxu0 %v585
    %683 = vmatpush1.bf16.msra.mxu0 %v584
    %684 = vmatprep.mubr.bf16.mxu0 %v269
    %685 = vmatmul.mubr.bf16.gmra.mrb[0].mxu0 %v268
    %v686 = vpop.f32.mrb[0].mxu0
    %v687 = vadd.f32 %v155, %v686
    %v688 = vpop.f32.mrb[0].mxu0
    %v689 = vadd.f32 %v159, %v688
    %v690 = vpop.f32.mrb[0].mxu0
    %v691 = vadd.f32 %v155, %v690
    %v692 = vpop.f32.mrb[0].mxu0
    %v693 = vadd.f32 %v159, %v692
    %694 = vmatprep.mubr.bf16.mxu0 %v271
    %695 = vmatmul.mubr.bf16.gmra.mrb[0].mxu0 %v270
    %v696 = vpop.f32.mrb[0].mxu0
    %v697 = vadd.f32 %v155, %v696
    %v698 = vpop.f32.mrb[0].mxu0
    %v699 = vadd.f32 %v159, %v698
    %v700 = vpop.f32.mrb[0].mxu0
    %v701 = vadd.f32 %v155, %v700
    %v702 = vpop.f32.mrb[0].mxu0
    %v703 = vadd.f32 %v159, %v702
    %704 = vmatprep.mubr.bf16.mxu0 %v273
    %705 = vmatmul.mubr.bf16.gmra.mrb[0].mxu0 %v272
    %v706 = vpop.f32.mrb[0].mxu0
    %v707 = vadd.f32 %v155, %v706
    %v708 = vpop.f32.mrb[0].mxu0
    %v709 = vadd.f32 %v159, %v708
    %v710 = vpop.f32.mrb[0].mxu0
    %v711 = vadd.f32 %v155, %v710
    %v712 = vpop.f32.mrb[0].mxu0
    %v713 = vadd.f32 %v159, %v712
    %714 = vmatprep.mubr.bf16.mxu0 %v275
    %715 = vmatmul.mubr.bf16.gmra.mrb[0].mxu0 %v274
    %v716 = vpop.f32.mrb[0].mxu0
    %v717 = vadd.f32 %v155, %v716
    %v718 = vpop.f32.mrb[0].mxu0
    %v719 = vadd.f32 %v159, %v718
    %v720 = vpop.f32.mrb[0].mxu0
    %v721 = vadd.f32 %v155, %v720
    %v722 = vpop.f32.mrb[0].mxu0
    %v723 = vadd.f32 %v159, %v722
    %724 = vmatprep.mubr.bf16.mxu0 %v277
    %725 = vmatmul.mubr.bf16.gmra.mrb[0].mxu0 %v276
    %v726 = vpop.f32.mrb[0].mxu0
    %v727 = vadd.f32 %v155, %v726
    %v728 = vpop.f32.mrb[0].mxu0
    %v729 = vadd.f32 %v159, %v728
    %v730 = vpop.f32.mrb[0].mxu0
    %v731 = vadd.f32 %v155, %v730
    %v732 = vpop.f32.mrb[0].mxu0
    %v733 = vadd.f32 %v159, %v732
    %734 = vmatprep.mubr.bf16.mxu0 %v279
    %735 = vmatmul.mubr.bf16.gmra.mrb[0].mxu0 %v278
    %v736 = vpop.f32.mrb[0].mxu0
    %v737 = vadd.f32 %v155, %v736
    %v738 = vpop.f32.mrb[0].mxu0
    %v739 = vadd.f32 %v159, %v738
    %v740 = vpop.f32.mrb[0].mxu0
    %v741 = vadd.f32 %v155, %v740
    %v742 = vpop.f32.mrb[0].mxu0
    %v743 = vadd.f32 %v159, %v742
    %744 = vmatprep.mubr.bf16.mxu0 %v281
    %745 = vmatmul.mubr.bf16.gmra.mrb[0].mxu0 %v280
    %v746 = vpop.f32.mrb[0].mxu0
    %v747 = vadd.f32 %v155, %v746
    %v748 = vpop.f32.mrb[0].mxu0
    %v749 = vadd.f32 %v159, %v748
    %v750 = vpop.f32.mrb[0].mxu0
    %v751 = vadd.f32 %v155, %v750
    %v752 = vpop.f32.mrb[0].mxu0
    %v753 = vadd.f32 %v159, %v752
    %754 = vmatprep.mubr.bf16.mxu0 %v283
    %755 = vmatmul.mubr.bf16.gmra.mrb[0].mxu0 %v282
    %v756 = vpop.f32.mrb[0].mxu0
    %v757 = vadd.f32 %v155, %v756
    %v758 = vpop.f32.mrb[0].mxu0
    %v759 = vadd.f32 %v159, %v758
    %v760 = vpop.f32.mrb[0].mxu0
    %v761 = vadd.f32 %v155, %v760
    %v762 = vpop.f32.mrb[0].mxu0
    %v763 = vadd.f32 %v159, %v762
    %764 = vmatprep.mubr.bf16.mxu0 %v285
    %765 = vmatmul.mubr.bf16.gmra.mrb[0].mxu0 %v284
    %v766 = vpop.f32.mrb[0].mxu0
    %v767 = vadd.f32 %v155, %v766
    %v768 = vpop.f32.mrb[0].mxu0
    %v769 = vadd.f32 %v159, %v768
    %v770 = vpop.f32.mrb[0].mxu0
    %v771 = vadd.f32 %v155, %v770
    %v772 = vpop.f32.mrb[0].mxu0
    %v773 = vadd.f32 %v159, %v772
    %774 = vmatprep.mubr.bf16.mxu0 %v287
    %775 = vmatmul.mubr.bf16.gmra.mrb[0].mxu0 %v286
    %v776 = vpop.f32.mrb[0].mxu0
    %v777 = vadd.f32 %v155, %v776
    %v778 = vpop.f32.mrb[0].mxu0
    %v779 = vadd.f32 %v159, %v778
    %v780 = vpop.f32.mrb[0].mxu0
    %v781 = vadd.f32 %v155, %v780
    %v782 = vpop.f32.mrb[0].mxu0
    %v783 = vadd.f32 %v159, %v782
    %784 = vmatprep.mubr.bf16.mxu0 %v289
    %785 = vmatmul.mubr.bf16.gmra.mrb[0].mxu0 %v288
    %v786 = vpop.f32.mrb[0].mxu0
    %v787 = vadd.f32 %v155, %v786
    %v788 = vpop.f32.mrb[0].mxu0
    %v789 = vadd.f32 %v159, %v788
    %v790 = vpop.f32.mrb[0].mxu0
    %v791 = vadd.f32 %v155, %v790
    %v792 = vpop.f32.mrb[0].mxu0
    %v793 = vadd.f32 %v159, %v792
    %794 = vmatprep.mubr.bf16.mxu0 %v291
    %795 = vmatmul.mubr.bf16.gmra.mrb[0].mxu0 %v290
    %v796 = vpop.f32.mrb[0].mxu0
    %v797 = vadd.f32 %v155, %v796
    %v798 = vpop.f32.mrb[0].mxu0
    %v799 = vadd.f32 %v159, %v798
    %v800 = vpop.f32.mrb[0].mxu0
    %v801 = vadd.f32 %v155, %v800
    %v802 = vpop.f32.mrb[0].mxu0
    %v803 = vadd.f32 %v159, %v802
    %804 = vmatprep.mubr.bf16.mxu0 %v293
    %805 = vmatmul.mubr.bf16.gmra.mrb[0].mxu0 %v292
    %v806 = vpop.f32.mrb[0].mxu0
    %v807 = vadd.f32 %v155, %v806
    %v808 = vpop.f32.mrb[0].mxu0
    %v809 = vadd.f32 %v159, %v808
    %v810 = vpop.f32.mrb[0].mxu0
    %v811 = vadd.f32 %v155, %v810
    %v812 = vpop.f32.mrb[0].mxu0
    %v813 = vadd.f32 %v159, %v812
    %814 = vmatprep.mubr.bf16.mxu0 %v295
    %815 = vmatmul.mubr.bf16.gmra.mrb[0].mxu0 %v294
    %v816 = vpop.f32.mrb[0].mxu0
    %v817 = vadd.f32 %v155, %v816
    %v818 = vpop.f32.mrb[0].mxu0
    %v819 = vadd.f32 %v159, %v818
    %v820 = vpop.f32.mrb[0].mxu0
    %v821 = vadd.f32 %v155, %v820
    %v822 = vpop.f32.mrb[0].mxu0
    %v823 = vadd.f32 %v159, %v822
    %824 = vmatprep.mubr.bf16.mxu0 %v297
    %825 = vmatmul.mubr.bf16.gmra.mrb[0].mxu0 %v296
    %v826 = vpop.f32.mrb[0].mxu0
    %v827 = vadd.f32 %v155, %v826
    %v828 = vpop.f32.mrb[0].mxu0
    %v829 = vadd.f32 %v159, %v828
    %v830 = vpop.f32.mrb[0].mxu0
    %v831 = vadd.f32 %v155, %v830
    %v832 = vpop.f32.mrb[0].mxu0
    %v833 = vadd.f32 %v159, %v832
    %834 = vmatprep.mubr.bf16.mxu0 %v299
    %835 = vmatmul.mubr.bf16.gmra.mrb[0].mxu0 %v298
    %v836 = vpop.f32.mrb[0].mxu0
    %v837 = vadd.f32 %v155, %v836
    %v838 = vpop.f32.mrb[0].mxu0
    %v839 = vadd.f32 %v159, %v838
    %v840 = vpop.f32.mrb[0].mxu0
    %v841 = vadd.f32 %v155, %v840
    %v842 = vpop.f32.mrb[0].mxu0
    %v843 = vadd.f32 %v159, %v842
    %844 = vdwg.mxu0
    %845 = vmatprep.subr.bf16.mxu0 %v527
    %846 = vmatpush1.bf16.msra.mxu0 %v526
    %847 = vmatprep.subr.bf16.mxu0 %v531
    %848 = vmatpush1.bf16.msra.mxu0 %v530
    %849 = vmatprep.subr.bf16.mxu0 %v535
    %850 = vmatpush1.bf16.msra.mxu0 %v534
    %851 = vmatprep.subr.bf16.mxu0 %v539
    %852 = vmatpush1.bf16.msra.mxu0 %v538
    %853 = vmatprep.subr.bf16.mxu0 %v543
    %854 = vmatpush1.bf16.msra.mxu0 %v542
    %855 = vmatprep.subr.bf16.mxu0 %v547
    %856 = vmatpush1.bf16.msra.mxu0 %v546
    %857 = vmatprep.subr.bf16.mxu0 %v551
    %858 = vmatpush1.bf16.msra.mxu0 %v550
    %859 = vmatprep.subr.bf16.mxu0 %v555
    %860 = vmatpush1.bf16.msra.mxu0 %v554
    %861 = vmatprep.subr.bf16.mxu0 %v559
    %862 = vmatpush1.bf16.msra.mxu0 %v558
    %863 = vmatprep.subr.bf16.mxu0 %v563
    %864 = vmatpush1.bf16.msra.mxu0 %v562
    %865 = vmatprep.subr.bf16.mxu0 %v567
    %866 = vmatpush1.bf16.msra.mxu0 %v566
    %867 = vmatprep.subr.bf16.mxu0 %v571
    %868 = vmatpush1.bf16.msra.mxu0 %v570
    %869 = vmatprep.subr.bf16.mxu0 %v575
    %870 = vmatpush1.bf16.msra.mxu0 %v574
    %871 = vmatprep.subr.bf16.mxu0 %v579
    %872 = vmatpush1.bf16.msra.mxu0 %v578
    %873 = vmatprep.subr.bf16.mxu0 %v583
    %874 = vmatpush1.bf16.msra.mxu0 %v582
    %875 = vmatprep.subr.bf16.mxu0 %v587
    %876 = vmatpush1.bf16.msra.mxu0 %v586
    %877 = vmatprep.mubr.bf16.mxu0 %v269
    %878 = vmatmul.mubr.bf16.gmra.mrb[0].mxu0 %v268
    %v879 = vpop.f32.mrb[0].mxu0
    %v880 = vadd.f32 %v163, %v879
    %v881 = vpop.f32.mrb[0].mxu0
    %v882 = vadd.f32 %v167, %v881
    %v883 = vpop.f32.mrb[0].mxu0
    %v884 = vadd.f32 %v163, %v883
    %v885 = vpop.f32.mrb[0].mxu0
    %v886 = vadd.f32 %v167, %v885
    %887 = vmatprep.mubr.bf16.mxu0 %v271
    %888 = vmatmul.mubr.bf16.gmra.mrb[0].mxu0 %v270
    %v889 = vpop.f32.mrb[0].mxu0
    %v890 = vadd.f32 %v163, %v889
    %v891 = vpop.f32.mrb[0].mxu0
    %v892 = vadd.f32 %v167, %v891
    %v893 = vpop.f32.mrb[0].mxu0
    %v894 = vadd.f32 %v163, %v893
    %v895 = vpop.f32.mrb[0].mxu0
    %v896 = vadd.f32 %v167, %v895
    %897 = vmatprep.mubr.bf16.mxu0 %v273
    %898 = vmatmul.mubr.bf16.gmra.mrb[0].mxu0 %v272
    %v899 = vpop.f32.mrb[0].mxu0
    %v900 = vadd.f32 %v163, %v899
    %v901 = vpop.f32.mrb[0].mxu0
    %v902 = vadd.f32 %v167, %v901
    %v903 = vpop.f32.mrb[0].mxu0
    %v904 = vadd.f32 %v163, %v903
    %v905 = vpop.f32.mrb[0].mxu0
    %v906 = vadd.f32 %v167, %v905
    %907 = vmatprep.mubr.bf16.mxu0 %v275
    %908 = vmatmul.mubr.bf16.gmra.mrb[0].mxu0 %v274
    %v909 = vpop.f32.mrb[0].mxu0
    %v910 = vadd.f32 %v163, %v909
    %v911 = vpop.f32.mrb[0].mxu0
    %v912 = vadd.f32 %v167, %v911
    %v913 = vpop.f32.mrb[0].mxu0
    %v914 = vadd.f32 %v163, %v913
    %v915 = vpop.f32.mrb[0].mxu0
    %v916 = vadd.f32 %v167, %v915
    %917 = vmatprep.mubr.bf16.mxu0 %v277
    %918 = vmatmul.mubr.bf16.gmra.mrb[0].mxu0 %v276
    %v919 = vpop.f32.mrb[0].mxu0
    %v920 = vadd.f32 %v163, %v919
    %v921 = vpop.f32.mrb[0].mxu0
    %v922 = vadd.f32 %v167, %v921
    %v923 = vpop.f32.mrb[0].mxu0
    %v924 = vadd.f32 %v163, %v923
    %v925 = vpop.f32.mrb[0].mxu0
    %v926 = vadd.f32 %v167, %v925
    %927 = vmatprep.mubr.bf16.mxu0 %v279
    %928 = vmatmul.mubr.bf16.gmra.mrb[0].mxu0 %v278
    %v929 = vpop.f32.mrb[0].mxu0
    %v930 = vadd.f32 %v163, %v929
    %v931 = vpop.f32.mrb[0].mxu0
    %v932 = vadd.f32 %v167, %v931
    %v933 = vpop.f32.mrb[0].mxu0
    %v934 = vadd.f32 %v163, %v933
    %v935 = vpop.f32.mrb[0].mxu0
    %v936 = vadd.f32 %v167, %v935
    %937 = vmatprep.mubr.bf16.mxu0 %v281
    %938 = vmatmul.mubr.bf16.gmra.mrb[0].mxu0 %v280
    %v939 = vpop.f32.mrb[0].mxu0
    %v940 = vadd.f32 %v163, %v939
    %v941 = vpop.f32.mrb[0].mxu0
    %v942 = vadd.f32 %v167, %v941
    %v943 = vpop.f32.mrb[0].mxu0
    %v944 = vadd.f32 %v163, %v943
    %v945 = vpop.f32.mrb[0].mxu0
    %v946 = vadd.f32 %v167, %v945
    %947 = vmatprep.mubr.bf16.mxu0 %v283
    %948 = vmatmul.mubr.bf16.gmra.mrb[0].mxu0 %v282
    %v949 = vpop.f32.mrb[0].mxu0
    %v950 = vadd.f32 %v163, %v949
    %v951 = vpop.f32.mrb[0].mxu0
    %v952 = vadd.f32 %v167, %v951
    %v953 = vpop.f32.mrb[0].mxu0
    %v954 = vadd.f32 %v163, %v953
    %v955 = vpop.f32.mrb[0].mxu0
    %v956 = vadd.f32 %v167, %v955
    %957 = vmatprep.mubr.bf16.mxu0 %v285
    %958 = vmatmul.mubr.bf16.gmra.mrb[0].mxu0 %v284
    %v959 = vpop.f32.mrb[0].mxu0
    %v960 = vadd.f32 %v163, %v959
    %v961 = vpop.f32.mrb[0].mxu0
    %v962 = vadd.f32 %v167, %v961
    %v963 = vpop.f32.mrb[0].mxu0
    %v964 = vadd.f32 %v163, %v963
    %v965 = vpop.f32.mrb[0].mxu0
    %v966 = vadd.f32 %v167, %v965
    %967 = vmatprep.mubr.bf16.mxu0 %v287
    %968 = vmatmul.mubr.bf16.gmra.mrb[0].mxu0 %v286
    %v969 = vpop.f32.mrb[0].mxu0
    %v970 = vadd.f32 %v163, %v969
    %v971 = vpop.f32.mrb[0].mxu0
    %v972 = vadd.f32 %v167, %v971
    %v973 = vpop.f32.mrb[0].mxu0
    %v974 = vadd.f32 %v163, %v973
    %v975 = vpop.f32.mrb[0].mxu0
    %v976 = vadd.f32 %v167, %v975
    %977 = vmatprep.mubr.bf16.mxu0 %v289
    %978 = vmatmul.mubr.bf16.gmra.mrb[0].mxu0 %v288
    %v979 = vpop.f32.mrb[0].mxu0
    %v980 = vadd.f32 %v163, %v979
    %v981 = vpop.f32.mrb[0].mxu0
    %v982 = vadd.f32 %v167, %v981
    %v983 = vpop.f32.mrb[0].mxu0
    %v984 = vadd.f32 %v163, %v983
    %v985 = vpop.f32.mrb[0].mxu0
    %v986 = vadd.f32 %v167, %v985
    %987 = vmatprep.mubr.bf16.mxu0 %v291
    %988 = vmatmul.mubr.bf16.gmra.mrb[0].mxu0 %v290
    %v989 = vpop.f32.mrb[0].mxu0
    %v990 = vadd.f32 %v163, %v989
    %v991 = vpop.f32.mrb[0].mxu0
    %v992 = vadd.f32 %v167, %v991
    %v993 = vpop.f32.mrb[0].mxu0
    %v994 = vadd.f32 %v163, %v993
    %v995 = vpop.f32.mrb[0].mxu0
    %v996 = vadd.f32 %v167, %v995
    %997 = vmatprep.mubr.bf16.mxu0 %v293
    %998 = vmatmul.mubr.bf16.gmra.mrb[0].mxu0 %v292
    %v999 = vpop.f32.mrb[0].mxu0
    %v1000 = vadd.f32 %v163, %v999
    %v1001 = vpop.f32.mrb[0].mxu0
    %v1002 = vadd.f32 %v167, %v1001
    %v1003 = vpop.f32.mrb[0].mxu0
    %v1004 = vadd.f32 %v163, %v1003
    %v1005 = vpop.f32.mrb[0].mxu0
    %v1006 = vadd.f32 %v167, %v1005
    %1007 = vmatprep.mubr.bf16.mxu0 %v295
    %1008 = vmatmul.mubr.bf16.gmra.mrb[0].mxu0 %v294
    %v1009 = vpop.f32.mrb[0].mxu0
    %v1010 = vadd.f32 %v163, %v1009
    %v1011 = vpop.f32.mrb[0].mxu0
    %v1012 = vadd.f32 %v167, %v1011
    %v1013 = vpop.f32.mrb[0].mxu0
    %v1014 = vadd.f32 %v163, %v1013
    %v1015 = vpop.f32.mrb[0].mxu0
    %v1016 = vadd.f32 %v167, %v1015
    %1017 = vmatprep.mubr.bf16.mxu0 %v297
    %1018 = vmatmul.mubr.bf16.gmra.mrb[0].mxu0 %v296
    %v1019 = vpop.f32.mrb[0].mxu0
    %v1020 = vadd.f32 %v163, %v1019
    %v1021 = vpop.f32.mrb[0].mxu0
    %v1022 = vadd.f32 %v167, %v1021
    %v1023 = vpop.f32.mrb[0].mxu0
    %v1024 = vadd.f32 %v163, %v1023
    %v1025 = vpop.f32.mrb[0].mxu0
    %v1026 = vadd.f32 %v167, %v1025
    %1027 = vmatprep.mubr.bf16.mxu0 %v299
    %1028 = vmatmul.mubr.bf16.gmra.mrb[0].mxu0 %v298
    %v1029 = vpop.f32.mrb[0].mxu0
    %v1030 = vadd.f32 %v163, %v1029
    %v1031 = vpop.f32.mrb[0].mxu0
    %v1032 = vadd.f32 %v167, %v1031
    %v1033 = vpop.f32.mrb[0].mxu0
    %v1034 = vadd.f32 %v163, %v1033
    %v1035 = vpop.f32.mrb[0].mxu0
    %v1036 = vadd.f32 %v167, %v1035
    %1037 = vdwg.mxu0
    %v1038 = vpack.c.bf16 %v691, %v687
    %v1039 = vpack.c.bf16 %v693, %v689
    %v1040 = vpack.c.bf16 %v884, %v880
    %v1041 = vpack.c.bf16 %v886, %v882
    %v1042 = vpack.c.bf16 %v701, %v697
    %v1043 = vpack.c.bf16 %v703, %v699
    %v1044 = vpack.c.bf16 %v894, %v890
    %v1045 = vpack.c.bf16 %v896, %v892
    %v1046 = vpack.c.bf16 %v711, %v707
    %v1047 = vpack.c.bf16 %v713, %v709
    %v1048 = vpack.c.bf16 %v904, %v900
    %v1049 = vpack.c.bf16 %v906, %v902
    %v1050 = vpack.c.bf16 %v721, %v717
    %v1051 = vpack.c.bf16 %v723, %v719
    %v1052 = vpack.c.bf16 %v914, %v910
    %v1053 = vpack.c.bf16 %v916, %v912
    %v1054 = vpack.c.bf16 %v731, %v727
    %v1055 = vpack.c.bf16 %v733, %v729
    %v1056 = vpack.c.bf16 %v924, %v920
    %v1057 = vpack.c.bf16 %v926, %v922
    %v1058 = vpack.c.bf16 %v741, %v737
    %v1059 = vpack.c.bf16 %v743, %v739
    %v1060 = vpack.c.bf16 %v934, %v930
    %v1061 = vpack.c.bf16 %v936, %v932
    %v1062 = vpack.c.bf16 %v751, %v747
    %v1063 = vpack.c.bf16 %v753, %v749
    %v1064 = vpack.c.bf16 %v944, %v940
    %v1065 = vpack.c.bf16 %v946, %v942
    %v1066 = vpack.c.bf16 %v761, %v757
    %v1067 = vpack.c.bf16 %v763, %v759
    %v1068 = vpack.c.bf16 %v954, %v950
    %v1069 = vpack.c.bf16 %v956, %v952
    %v1070 = vpack.c.bf16 %v771, %v767
    %v1071 = vpack.c.bf16 %v773, %v769
    %v1072 = vpack.c.bf16 %v964, %v960
    %v1073 = vpack.c.bf16 %v966, %v962
    %v1074 = vpack.c.bf16 %v781, %v777
    %v1075 = vpack.c.bf16 %v783, %v779
    %v1076 = vpack.c.bf16 %v974, %v970
    %v1077 = vpack.c.bf16 %v976, %v972
    %v1078 = vpack.c.bf16 %v791, %v787
    %v1079 = vpack.c.bf16 %v793, %v789
    %v1080 = vpack.c.bf16 %v984, %v980
    %v1081 = vpack.c.bf16 %v986, %v982
    %v1082 = vpack.c.bf16 %v801, %v797
    %v1083 = vpack.c.bf16 %v803, %v799
    %v1084 = vpack.c.bf16 %v994, %v990
    %v1085 = vpack.c.bf16 %v996, %v992
    %v1086 = vpack.c.bf16 %v811, %v807
    %v1087 = vpack.c.bf16 %v813, %v809
    %v1088 = vpack.c.bf16 %v1004, %v1000
    %v1089 = vpack.c.bf16 %v1006, %v1002
    %v1090 = vpack.c.bf16 %v821, %v817
    %v1091 = vpack.c.bf16 %v823, %v819
    %v1092 = vpack.c.bf16 %v1014, %v1010
    %v1093 = vpack.c.bf16 %v1016, %v1012
    %v1094 = vpack.c.bf16 %v831, %v827
    %v1095 = vpack.c.bf16 %v833, %v829
    %v1096 = vpack.c.bf16 %v1024, %v1020
    %v1097 = vpack.c.bf16 %v1026, %v1022
    %v1098 = vpack.c.bf16 %v841, %v837
    %v1099 = vpack.c.bf16 %v843, %v839
    %v1100 = vpack.c.bf16 %v1034, %v1030
    %v1101 = vpack.c.bf16 %v1036, %v1032
    %v1166 = vunpack.c.l.b16 %v1038
    %v1167 = vunpack.c.l.b16 %v1039
    %v1168 = vunpack.c.l.b16 %v1040
    %v1169 = vunpack.c.l.b16 %v1041
    %v1170 = vunpack.c.h.b16 %v1038
    %v1171 = vunpack.c.h.b16 %v1039
    %v1172 = vunpack.c.h.b16 %v1040
    %v1173 = vunpack.c.h.b16 %v1041
    %v1174 = vunpack.c.l.b16 %v1042
    %v1175 = vunpack.c.l.b16 %v1043
    %v1176 = vunpack.c.l.b16 %v1044
    %v1177 = vunpack.c.l.b16 %v1045
    %v1178 = vunpack.c.h.b16 %v1042
    %v1179 = vunpack.c.h.b16 %v1043
    %v1180 = vunpack.c.h.b16 %v1044
    %v1181 = vunpack.c.h.b16 %v1045
    %v1182 = vunpack.c.l.b16 %v1046
    %v1183 = vunpack.c.l.b16 %v1047
    %v1184 = vunpack.c.l.b16 %v1048
    %v1185 = vunpack.c.l.b16 %v1049
    %v1186 = vunpack.c.h.b16 %v1046
    %v1187 = vunpack.c.h.b16 %v1047
    %v1188 = vunpack.c.h.b16 %v1048
    %v1189 = vunpack.c.h.b16 %v1049
    %v1190 = vunpack.c.l.b16 %v1050
    %v1191 = vunpack.c.l.b16 %v1051
    %v1192 = vunpack.c.l.b16 %v1052
    %v1193 = vunpack.c.l.b16 %v1053
    %v1194 = vunpack.c.h.b16 %v1050
    %v1195 = vunpack.c.h.b16 %v1051
    %v1196 = vunpack.c.h.b16 %v1052
    %v1197 = vunpack.c.h.b16 %v1053
    %v1198 = vunpack.c.l.b16 %v1054
    %v1199 = vunpack.c.l.b16 %v1055
    %v1200 = vunpack.c.l.b16 %v1056
    %v1201 = vunpack.c.l.b16 %v1057
    %v1202 = vunpack.c.h.b16 %v1054
    %v1203 = vunpack.c.h.b16 %v1055
    %v1204 = vunpack.c.h.b16 %v1056
    %v1205 = vunpack.c.h.b16 %v1057
    %v1206 = vunpack.c.l.b16 %v1058
    %v1207 = vunpack.c.l.b16 %v1059
    %v1208 = vunpack.c.l.b16 %v1060
    %v1209 = vunpack.c.l.b16 %v1061
    %v1210 = vunpack.c.h.b16 %v1058
    %v1211 = vunpack.c.h.b16 %v1059
    %v1212 = vunpack.c.h.b16 %v1060
    %v1213 = vunpack.c.h.b16 %v1061
    %v1214 = vunpack.c.l.b16 %v1062
    %v1215 = vunpack.c.l.b16 %v1063
    %v1216 = vunpack.c.l.b16 %v1064
    %v1217 = vunpack.c.l.b16 %v1065
    %v1218 = vunpack.c.h.b16 %v1062
    %v1219 = vunpack.c.h.b16 %v1063
    %v1220 = vunpack.c.h.b16 %v1064
    %v1221 = vunpack.c.h.b16 %v1065
    %v1222 = vunpack.c.l.b16 %v1066
    %v1223 = vunpack.c.l.b16 %v1067
    %v1224 = vunpack.c.l.b16 %v1068
    %v1225 = vunpack.c.l.b16 %v1069
    %v1226 = vunpack.c.h.b16 %v1066
    %v1227 = vunpack.c.h.b16 %v1067
    %v1228 = vunpack.c.h.b16 %v1068
    %v1229 = vunpack.c.h.b16 %v1069
    %v1230 = vunpack.c.l.b16 %v1070
    %v1231 = vunpack.c.l.b16 %v1071
    %v1232 = vunpack.c.l.b16 %v1072
    %v1233 = vunpack.c.l.b16 %v1073
    %v1234 = vunpack.c.h.b16 %v1070
    %v1235 = vunpack.c.h.b16 %v1071
    %v1236 = vunpack.c.h.b16 %v1072
    %v1237 = vunpack.c.h.b16 %v1073
    %v1238 = vunpack.c.l.b16 %v1074
    %v1239 = vunpack.c.l.b16 %v1075
    %v1240 = vunpack.c.l.b16 %v1076
    %v1241 = vunpack.c.l.b16 %v1077
    %v1242 = vunpack.c.h.b16 %v1074
    %v1243 = vunpack.c.h.b16 %v1075
    %v1244 = vunpack.c.h.b16 %v1076
    %v1245 = vunpack.c.h.b16 %v1077
    %v1246 = vunpack.c.l.b16 %v1078
    %v1247 = vunpack.c.l.b16 %v1079
    %v1248 = vunpack.c.l.b16 %v1080
    %v1249 = vunpack.c.l.b16 %v1081
    %v1250 = vunpack.c.h.b16 %v1078
    %v1251 = vunpack.c.h.b16 %v1079
    %v1252 = vunpack.c.h.b16 %v1080
    %v1253 = vunpack.c.h.b16 %v1081
    %v1254 = vunpack.c.l.b16 %v1082
    %v1255 = vunpack.c.l.b16 %v1083
    %v1256 = vunpack.c.l.b16 %v1084
    %v1257 = vunpack.c.l.b16 %v1085
    %v1258 = vunpack.c.h.b16 %v1082
    %v1259 = vunpack.c.h.b16 %v1083
    %v1260 = vunpack.c.h.b16 %v1084
    %v1261 = vunpack.c.h.b16 %v1085
    %v1262 = vunpack.c.l.b16 %v1086
    %v1263 = vunpack.c.l.b16 %v1087
    %v1264 = vunpack.c.l.b16 %v1088
    %v1265 = vunpack.c.l.b16 %v1089
    %v1266 = vunpack.c.h.b16 %v1086
    %v1267 = vunpack.c.h.b16 %v1087
    %v1268 = vunpack.c.h.b16 %v1088
    %v1269 = vunpack.c.h.b16 %v1089
    %v1270 = vunpack.c.l.b16 %v1090
    %v1271 = vunpack.c.l.b16 %v1091
    %v1272 = vunpack.c.l.b16 %v1092
    %v1273 = vunpack.c.l.b16 %v1093
    %v1274 = vunpack.c.h.b16 %v1090
    %v1275 = vunpack.c.h.b16 %v1091
    %v1276 = vunpack.c.h.b16 %v1092
    %v1277 = vunpack.c.h.b16 %v1093
    %v1278 = vunpack.c.l.b16 %v1094
    %v1279 = vunpack.c.l.b16 %v1095
    %v1280 = vunpack.c.l.b16 %v1096
    %v1281 = vunpack.c.l.b16 %v1097
    %v1282 = vunpack.c.h.b16 %v1094
    %v1283 = vunpack.c.h.b16 %v1095
    %v1284 = vunpack.c.h.b16 %v1096
    %v1285 = vunpack.c.h.b16 %v1097
    %v1286 = vunpack.c.l.b16 %v1098
    %v1287 = vunpack.c.l.b16 %v1099
    %v1288 = vunpack.c.l.b16 %v1100
    %v1289 = vunpack.c.l.b16 %v1101
    %v1290 = vunpack.c.h.b16 %v1098
    %v1291 = vunpack.c.h.b16 %v1099
    %v1292 = vunpack.c.h.b16 %v1100
    %v1293 = vunpack.c.h.b16 %v1101
    %v1294 = vpack.c.b16 %v1167, %v1166
    %v1295 = vpack.c.b16 %v1169, %v1168
    %v1296 = vpack.c.b16 %v1171, %v1170
    %v1297 = vpack.c.b16 %v1173, %v1172
    %v1298 = vpack.c.b16 %v1175, %v1174
    %v1299 = vpack.c.b16 %v1177, %v1176
    %v1300 = vpack.c.b16 %v1179, %v1178
    %v1301 = vpack.c.b16 %v1181, %v1180
    %v1302 = vpack.c.b16 %v1183, %v1182
    %v1303 = vpack.c.b16 %v1185, %v1184
    %v1304 = vpack.c.b16 %v1187, %v1186
    %v1305 = vpack.c.b16 %v1189, %v1188
    %v1306 = vpack.c.b16 %v1191, %v1190
    %v1307 = vpack.c.b16 %v1193, %v1192
    %v1308 = vpack.c.b16 %v1195, %v1194
    %v1309 = vpack.c.b16 %v1197, %v1196
    %v1310 = vpack.c.b16 %v1199, %v1198
    %v1311 = vpack.c.b16 %v1201, %v1200
    %v1312 = vpack.c.b16 %v1203, %v1202
    %v1313 = vpack.c.b16 %v1205, %v1204
    %v1314 = vpack.c.b16 %v1207, %v1206
    %v1315 = vpack.c.b16 %v1209, %v1208
    %v1316 = vpack.c.b16 %v1211, %v1210
    %v1317 = vpack.c.b16 %v1213, %v1212
    %v1318 = vpack.c.b16 %v1215, %v1214
    %v1319 = vpack.c.b16 %v1217, %v1216
    %v1320 = vpack.c.b16 %v1219, %v1218
    %v1321 = vpack.c.b16 %v1221, %v1220
    %v1322 = vpack.c.b16 %v1223, %v1222
    %v1323 = vpack.c.b16 %v1225, %v1224
    %v1324 = vpack.c.b16 %v1227, %v1226
    %v1325 = vpack.c.b16 %v1229, %v1228
    %v1326 = vpack.c.b16 %v1231, %v1230
    %v1327 = vpack.c.b16 %v1233, %v1232
    %v1328 = vpack.c.b16 %v1235, %v1234
    %v1329 = vpack.c.b16 %v1237, %v1236
    %v1330 = vpack.c.b16 %v1239, %v1238
    %v1331 = vpack.c.b16 %v1241, %v1240
    %v1332 = vpack.c.b16 %v1243, %v1242
    %v1333 = vpack.c.b16 %v1245, %v1244
    %v1334 = vpack.c.b16 %v1247, %v1246
    %v1335 = vpack.c.b16 %v1249, %v1248
    %v1336 = vpack.c.b16 %v1251, %v1250
    %v1337 = vpack.c.b16 %v1253, %v1252
    %v1338 = vpack.c.b16 %v1255, %v1254
    %v1339 = vpack.c.b16 %v1257, %v1256
    %v1340 = vpack.c.b16 %v1259, %v1258
    %v1341 = vpack.c.b16 %v1261, %v1260
    %v1342 = vpack.c.b16 %v1263, %v1262
    %v1343 = vpack.c.b16 %v1265, %v1264
    %v1344 = vpack.c.b16 %v1267, %v1266
    %v1345 = vpack.c.b16 %v1269, %v1268
    %v1346 = vpack.c.b16 %v1271, %v1270
    %v1347 = vpack.c.b16 %v1273, %v1272
    %v1348 = vpack.c.b16 %v1275, %v1274
    %v1349 = vpack.c.b16 %v1277, %v1276
    %v1350 = vpack.c.b16 %v1279, %v1278
    %v1351 = vpack.c.b16 %v1281, %v1280
    %v1352 = vpack.c.b16 %v1283, %v1282
    %v1353 = vpack.c.b16 %v1285, %v1284
    %v1354 = vpack.c.b16 %v1287, %v1286
    %v1355 = vpack.c.b16 %v1289, %v1288
    %v1356 = vpack.c.b16 %v1291, %v1290
    %v1357 = vpack.c.b16 %v1293, %v1292
    %1422 = vst [vmem:[#allocation8] sm:$0xff] %v1294
    %1423 = vst [vmem:[#allocation8 + $0x8] sm:$0xff] %v1295
    %1424 = vst [vmem:[#allocation8 + $0x10] sm:$0xff] %v1296
    %1425 = vst [vmem:[#allocation8 + $0x18] sm:$0xff] %v1297
    %1426 = vst [vmem:[#allocation8 + $0x20] sm:$0xff] %v1298
    %1427 = vst [vmem:[#allocation8 + $0x28] sm:$0xff] %v1299
    %1428 = vst [vmem:[#allocation8 + $0x30] sm:$0xff] %v1300
    %1429 = vst [vmem:[#allocation8 + $0x38] sm:$0xff] %v1301
    %1430 = vst [vmem:[#allocation8 + $0x40] sm:$0xff] %v1302
    %1431 = vst [vmem:[#allocation8 + $0x48] sm:$0xff] %v1303
    %1432 = vst [vmem:[#allocation8 + $0x50] sm:$0xff] %v1304
    %1433 = vst [vmem:[#allocation8 + $0x58] sm:$0xff] %v1305
    %1434 = vst [vmem:[#allocation8 + $0x60] sm:$0xff] %v1306
    %1435 = vst [vmem:[#allocation8 + $0x68] sm:$0xff] %v1307
    %1436 = vst [vmem:[#allocation8 + $0x70] sm:$0xff] %v1308
    %1437 = vst [vmem:[#allocation8 + $0x78] sm:$0xff] %v1309
    %1438 = vst [vmem:[#allocation8 + $0x80] sm:$0xff] %v1310
    %1439 = vst [vmem:[#allocation8 + $0x88] sm:$0xff] %v1311
    %1440 = vst [vmem:[#allocation8 + $0x90] sm:$0xff] %v1312
    %1441 = vst [vmem:[#allocation8 + $0x98] sm:$0xff] %v1313
    %1442 = vst [vmem:[#allocation8 + $0xa0] sm:$0xff] %v1314
    %1443 = vst [vmem:[#allocation8 + $0xa8] sm:$0xff] %v1315
    %1444 = vst [vmem:[#allocation8 + $0xb0] sm:$0xff] %v1316
    %1445 = vst [vmem:[#allocation8 + $0xb8] sm:$0xff] %v1317
    %1446 = vst [vmem:[#allocation8 + $0xc0] sm:$0xff] %v1318
    %1447 = vst [vmem:[#allocation8 + $0xc8] sm:$0xff] %v1319
    %1448 = vst [vmem:[#allocation8 + $0xd0] sm:$0xff] %v1320
    %1449 = vst [vmem:[#allocation8 + $0xd8] sm:$0xff] %v1321
    %1450 = vst [vmem:[#allocation8 + $0xe0] sm:$0xff] %v1322
    %1451 = vst [vmem:[#allocation8 + $0xe8] sm:$0xff] %v1323
    %1452 = vst [vmem:[#allocation8 + $0xf0] sm:$0xff] %v1324
    %1453 = vst [vmem:[#allocation8 + $0xf8] sm:$0xff] %v1325
    %1454 = vst [vmem:[#allocation8 + $0x100] sm:$0xff] %v1326
    %1455 = vst [vmem:[#allocation8 + $0x108] sm:$0xff] %v1327
    %1456 = vst [vmem:[#allocation8 + $0x110] sm:$0xff] %v1328
    %1457 = vst [vmem:[#allocation8 + $0x118] sm:$0xff] %v1329
    %1458 = vst [vmem:[#allocation8 + $0x120] sm:$0xff] %v1330
    %1459 = vst [vmem:[#allocation8 + $0x128] sm:$0xff] %v1331
    %1460 = vst [vmem:[#allocation8 + $0x130] sm:$0xff] %v1332
    %1461 = vst [vmem:[#allocation8 + $0x138] sm:$0xff] %v1333
    %1462 = vst [vmem:[#allocation8 + $0x140] sm:$0xff] %v1334
    %1463 = vst [vmem:[#allocation8 + $0x148] sm:$0xff] %v1335
    %1464 = vst [vmem:[#allocation8 + $0x150] sm:$0xff] %v1336
    %1465 = vst [vmem:[#allocation8 + $0x158] sm:$0xff] %v1337
    %1466 = vst [vmem:[#allocation8 + $0x160] sm:$0xff] %v1338
    %1467 = vst [vmem:[#allocation8 + $0x168] sm:$0xff] %v1339
    %1468 = vst [vmem:[#allocation8 + $0x170] sm:$0xff] %v1340
    %1469 = vst [vmem:[#allocation8 + $0x178] sm:$0xff] %v1341
    %1470 = vst [vmem:[#allocation8 + $0x180] sm:$0xff] %v1342
    %1471 = vst [vmem:[#allocation8 + $0x188] sm:$0xff] %v1343
    %1472 = vst [vmem:[#allocation8 + $0x190] sm:$0xff] %v1344
    %1473 = vst [vmem:[#allocation8 + $0x198] sm:$0xff] %v1345
    %1474 = vst [vmem:[#allocation8 + $0x1a0] sm:$0xff] %v1346
    %1475 = vst [vmem:[#allocation8 + $0x1a8] sm:$0xff] %v1347
    %1476 = vst [vmem:[#allocation8 + $0x1b0] sm:$0xff] %v1348
    %1477 = vst [vmem:[#allocation8 + $0x1b8] sm:$0xff] %v1349
    %1478 = vst [vmem:[#allocation8 + $0x1c0] sm:$0xff] %v1350
    %1479 = vst [vmem:[#allocation8 + $0x1c8] sm:$0xff] %v1351
    %1480 = vst [vmem:[#allocation8 + $0x1d0] sm:$0xff] %v1352
    %1481 = vst [vmem:[#allocation8 + $0x1d8] sm:$0xff] %v1353
    %1482 = vst [vmem:[#allocation8 + $0x1e0] sm:$0xff] %v1354
    %1483 = vst [vmem:[#allocation8 + $0x1e8] sm:$0xff] %v1355
    %1484 = vst [vmem:[#allocation8 + $0x1f0] sm:$0xff] %v1356
    %1485 = vst [vmem:[#allocation8 + $0x1f8] sm:$0xff] %v1357
    // Predicated region
    $region26: #{lstm_forward.3} parent=1 // pred_check
      _
    $region27: #{lstm_forward.3} parent=1 // pred_check_branch
      %1487 = sbr.rel (0) target = $region29
    $region28: #{lstm_forward.3} parent=1 // pred_region
      %s1489 = ssub.s32 8192, 8192
      %1490 = vsyncadd [#allocation4], %s1489
      %s1491 = sshll.u32 [#allocation8], 4
      %s1492 = int_to_ptr.vmem [resolvable:$true] %s1491
      %1497 = dma.vmem_to_hbm [thread:$0]  %s1492, 8192, %s3, [#allocation4], 256, 256, 16
    $region29: #{lstm_forward.3} parent=1 // pred_fallthru
      _
    // Predicated region
    $region30: #{lstm_forward.3} parent=1 // pred_check
      _
    $region31: #{lstm_forward.3} parent=1 // pred_check_branch
      %1499 = sbr.rel (0) target = $region33
    $region32: #{lstm_forward.3} parent=1 // pred_region
      %1500 = dma.done [#allocation4], 8192
    $region33: #{lstm_forward.3} parent=1 // pred_fallthru
      _
    %1501 = vsyncpa [#allocation3], 1
    %1502 = vsyncpa [#allocation6], 1
    %1503 = vsyncpa [#allocation4], 1

// kernel: lstm_forward.5
$region0: #{lstm_forward.5}
  #allocation0 [shape = 'u32[]', space=smem, size = 0x4, offset = 0x4, fixed_abs, tag = 'smem constant byte address 0x4 - core index']
  #allocation1 [shape = 'u32[144,128]{1,0:T(1,128)}', space=vmem, size = 0x12000, scoped, tag = 'internal scratch']
  %s0 = inlined_call_operand.hbm [shape: f32[256,128], index: 0, kind: input, shape index: {}]
  %s1 = inlined_call_operand.hbm [shape: bf16[128,256], index: 1, kind: input, shape index: {}]
  %s2 = inlined_call_operand.hbm [shape: f32[1,256], index: 2, kind: input, shape index: {}]
  %s3 = inlined_call_operand.hbm [shape: f32[256,256], index: 3, kind: output, shape index: {}]
  %s4 = sld [smem:[#allocation0]]
  $region34: #{lstm_forward.5} parent=0
    _
  %s6 = ssub.s32 1, %s4
  %s7 = scalar_select 0, %s6, %s4
  $region1: #{lstm_forward.5} parent=0
    #allocation2 [shape = 'u8[131072]{0}', space=vmem, size = 0x20000, scoped, tag = 'input window, operand 0, single buffered']
    #allocation3 [shape = 's32[1]{0}', space=sflag, size = 0x4, scoped, tag = 'scoped memory for lstm_forward.5']
    #allocation4 [shape = 's32[1]{0}', space=sflag, size = 0x4, scoped, tag = 'scoped memory for lstm_forward.5']
    #allocation5 [shape = 'u8[65536]{0}', space=vmem, size = 0x10000, scoped, tag = 'input window, operand 1, single buffered']
    #allocation6 [shape = 's32[1]{0}', space=sflag, size = 0x4, scoped, tag = 'scoped memory for lstm_forward.5']
    #allocation7 [shape = 'u8[1024]{0}', space=vmem, size = 0x400, scoped, tag = 'input window, operand 2, single buffered']
    #allocation8 [shape = 'u8[262144]{0}', space=vmem, size = 0x40000, scoped, tag = 'output window, operand 0, single buffered']
    %8 = vsyncpa [#allocation3], 0
    %9 = vsyncpa [#allocation6], 0
    %10 = vsyncpa [#allocation4], 0
    // Predicated region
    $region2: #{lstm_forward.5} parent=1 // pred_check
      _
    $region3: #{lstm_forward.5} parent=1 // pred_check_branch
      %12 = sbr.rel (0) target = $region5
    $region4: #{lstm_forward.5} parent=1 // pred_region
      %s14 = ssub.s32 4096, 4096
      %15 = vsyncadd [#allocation3], %s14
      %s16 = sshll.u32 [#allocation2], 4
      %s17 = int_to_ptr.vmem [resolvable:$true] %s16
      %22 = dma.hbm_to_vmem [thread:$0]  %s0, 4096, %s17, [#allocation3], 128, 128, 8
    $region5: #{lstm_forward.5} parent=1 // pred_fallthru
      _
    // Predicated region
    $region6: #{lstm_forward.5} parent=1 // pred_check
      _
    $region7: #{lstm_forward.5} parent=1 // pred_check_branch
      %24 = sbr.rel (0) target = $region9
    $region8: #{lstm_forward.5} parent=1 // pred_region
      %s26 = ssub.s32 2048, 2048
      %27 = vsyncadd [#allocation6], %s26
      %s28 = sshll.u32 [#allocation5], 4
      %s29 = int_to_ptr.vmem [resolvable:$true] %s28
      %34 = dma.hbm_to_vmem [thread:$0]  %s1, 2048, %s29, [#allocation6], 128, 128, 8
    $region9: #{lstm_forward.5} parent=1 // pred_fallthru
      _
    // Predicated region
    $region10: #{lstm_forward.5} parent=1 // pred_check
      _
    $region11: #{lstm_forward.5} parent=1 // pred_check_branch
      %36 = sbr.rel (0) target = $region13
    $region12: #{lstm_forward.5} parent=1 // pred_region
      %s38 = ssub.s32 32, 32
      %39 = vsyncadd [#allocation6], %s38
      %s41 = sshll.u32 [#allocation7], 4
      %s42 = int_to_ptr.vmem [resolvable:$true] %s41
      %44 = dma.hbm_to_vmem [thread:$0]  %s2, 32, %s42, [#allocation6]
    $region13: #{lstm_forward.5} parent=1 // pred_fallthru
      _
    // Predicated region
    $region14: #{lstm_forward.5} parent=1 // pred_check
      _
    $region15: #{lstm_forward.5} parent=1 // pred_check_branch
      %46 = sbr.rel (0) target = $region17
    $region16: #{lstm_forward.5} parent=1 // pred_region
      %47 = dma.done [#allocation3], 4096
    $region17: #{lstm_forward.5} parent=1 // pred_fallthru
      _
    // Predicated region
    $region18: #{lstm_forward.5} parent=1 // pred_check
      _
    $region19: #{lstm_forward.5} parent=1 // pred_check_branch
      %49 = sbr.rel (0) target = $region21
    $region20: #{lstm_forward.5} parent=1 // pred_region
      %50 = dma.done [#allocation6], 2048
    $region21: #{lstm_forward.5} parent=1 // pred_fallthru
      _
    // Predicated region
    $region22: #{lstm_forward.5} parent=1 // pred_check
      _
    $region23: #{lstm_forward.5} parent=1 // pred_check_branch
      %52 = sbr.rel (0) target = $region25
    $region24: #{lstm_forward.5} parent=1 // pred_region
      %53 = dma.done [#allocation6], 32
    $region25: #{lstm_forward.5} parent=1 // pred_fallthru
      _
    %v55 = vld [vmem:[#allocation2] sm:$0xff]
    %v56 = vld [vmem:[#allocation2 + $0x8] sm:$0xff]
    %v57 = vld [vmem:[#allocation2 + $0x10] sm:$0xff]
    %v58 = vld [vmem:[#allocation2 + $0x18] sm:$0xff]
    %v59 = vld [vmem:[#allocation2 + $0x20] sm:$0xff]
    %v60 = vld [vmem:[#allocation2 + $0x28] sm:$0xff]
    %v61 = vld [vmem:[#allocation2 + $0x30] sm:$0xff]
    %v62 = vld [vmem:[#allocation2 + $0x38] sm:$0xff]
    %v63 = vld [vmem:[#allocation2 + $0x40] sm:$0xff]
    %v64 = vld [vmem:[#allocation2 + $0x48] sm:$0xff]
    %v65 = vld [vmem:[#allocation2 + $0x50] sm:$0xff]
    %v66 = vld [vmem:[#allocation2 + $0x58] sm:$0xff]
    %v67 = vld [vmem:[#allocation2 + $0x60] sm:$0xff]
    %v68 = vld [vmem:[#allocation2 + $0x68] sm:$0xff]
    %v69 = vld [vmem:[#allocation2 + $0x70] sm:$0xff]
    %v70 = vld [vmem:[#allocation2 + $0x78] sm:$0xff]
    %v71 = vld [vmem:[#allocation2 + $0x80] sm:$0xff]
    %v72 = vld [vmem:[#allocation2 + $0x88] sm:$0xff]
    %v73 = vld [vmem:[#allocation2 + $0x90] sm:$0xff]
    %v74 = vld [vmem:[#allocation2 + $0x98] sm:$0xff]
    %v75 = vld [vmem:[#allocation2 + $0xa0] sm:$0xff]
    %v76 = vld [vmem:[#allocation2 + $0xa8] sm:$0xff]
    %v77 = vld [vmem:[#allocation2 + $0xb0] sm:$0xff]
    %v78 = vld [vmem:[#allocation2 + $0xb8] sm:$0xff]
    %v79 = vld [vmem:[#allocation2 + $0xc0] sm:$0xff]
    %v80 = vld [vmem:[#allocation2 + $0xc8] sm:$0xff]
    %v81 = vld [vmem:[#allocation2 + $0xd0] sm:$0xff]
    %v82 = vld [vmem:[#allocation2 + $0xd8] sm:$0xff]
    %v83 = vld [vmem:[#allocation2 + $0xe0] sm:$0xff]
    %v84 = vld [vmem:[#allocation2 + $0xe8] sm:$0xff]
    %v85 = vld [vmem:[#allocation2 + $0xf0] sm:$0xff]
    %v86 = vld [vmem:[#allocation2 + $0xf8] sm:$0xff]
    %v87 = vpack.c.bf16 %v56, %v55
    %v88 = vpack.c.bf16 %v58, %v57
    %v89 = vpack.c.bf16 %v60, %v59
    %v90 = vpack.c.bf16 %v62, %v61
    %v91 = vpack.c.bf16 %v64, %v63
    %v92 = vpack.c.bf16 %v66, %v65
    %v93 = vpack.c.bf16 %v68, %v67
    %v94 = vpack.c.bf16 %v70, %v69
    %v95 = vpack.c.bf16 %v72, %v71
    %v96 = vpack.c.bf16 %v74, %v73
    %v97 = vpack.c.bf16 %v76, %v75
    %v98 = vpack.c.bf16 %v78, %v77
    %v99 = vpack.c.bf16 %v80, %v79
    %v100 = vpack.c.bf16 %v82, %v81
    %v101 = vpack.c.bf16 %v84, %v83
    %v102 = vpack.c.bf16 %v86, %v85
    %v103 = vld [vmem:[#allocation5] sm:$0xff]
    %v104 = vld [vmem:[#allocation5 + $0x8] sm:$0xff]
    %v105 = vld [vmem:[#allocation5 + $0x10] sm:$0xff]
    %v106 = vld [vmem:[#allocation5 + $0x18] sm:$0xff]
    %v107 = vld [vmem:[#allocation5 + $0x20] sm:$0xff]
    %v108 = vld [vmem:[#allocation5 + $0x28] sm:$0xff]
    %v109 = vld [vmem:[#allocation5 + $0x30] sm:$0xff]
    %v110 = vld [vmem:[#allocation5 + $0x38] sm:$0xff]
    %v111 = vld [vmem:[#allocation5 + $0x40] sm:$0xff]
    %v112 = vld [vmem:[#allocation5 + $0x48] sm:$0xff]
    %v113 = vld [vmem:[#allocation5 + $0x50] sm:$0xff]
    %v114 = vld [vmem:[#allocation5 + $0x58] sm:$0xff]
    %v115 = vld [vmem:[#allocation5 + $0x60] sm:$0xff]
    %v116 = vld [vmem:[#allocation5 + $0x68] sm:$0xff]
    %v117 = vld [vmem:[#allocation5 + $0x70] sm:$0xff]
    %v118 = vld [vmem:[#allocation5 + $0x78] sm:$0xff]
    %v119 = vld [vmem:[#allocation7] sm:$0x3]
    %v121 = vlaneseq
    %v122 = vshrl.u32 %v121, 7
    %v123 = vsub.s32 0, %v122
    %v124 = vrot.slane %v119, %v123
    %v125 = vlaneseq
    %v126 = vshrl.u32 %v125, 7
    %v127 = vsub.s32 1, %v126
    %v128 = vrot.slane %v119, %v127
    %v147 = vunpack.c.l.b16 %v103
    %v148 = vunpack.c.h.b16 %v103
    %v149 = vunpack.c.l.b16 %v104
    %v150 = vunpack.c.h.b16 %v104
    %v151 = vunpack.c.l.b16 %v105
    %v152 = vunpack.c.h.b16 %v105
    %v153 = vunpack.c.l.b16 %v106
    %v154 = vunpack.c.h.b16 %v106
    %v155 = vunpack.c.l.b16 %v107
    %v156 = vunpack.c.h.b16 %v107
    %v157 = vunpack.c.l.b16 %v108
    %v158 = vunpack.c.h.b16 %v108
    %v159 = vunpack.c.l.b16 %v109
    %v160 = vunpack.c.h.b16 %v109
    %v161 = vunpack.c.l.b16 %v110
    %v162 = vunpack.c.h.b16 %v110
    %v163 = vunpack.c.l.b16 %v111
    %v164 = vunpack.c.h.b16 %v111
    %v165 = vunpack.c.l.b16 %v112
    %v166 = vunpack.c.h.b16 %v112
    %v167 = vunpack.c.l.b16 %v113
    %v168 = vunpack.c.h.b16 %v113
    %v169 = vunpack.c.l.b16 %v114
    %v170 = vunpack.c.h.b16 %v114
    %v171 = vunpack.c.l.b16 %v115
    %v172 = vunpack.c.h.b16 %v115
    %v173 = vunpack.c.l.b16 %v116
    %v174 = vunpack.c.h.b16 %v116
    %v175 = vunpack.c.l.b16 %v117
    %v176 = vunpack.c.h.b16 %v117
    %v177 = vunpack.c.l.b16 %v118
    %v178 = vunpack.c.h.b16 %v118
    %v179 = vpack.c.b16 %v149, %v147
    %v180 = vpack.c.b16 %v150, %v148
    %v181 = vpack.c.b16 %v153, %v151
    %v182 = vpack.c.b16 %v154, %v152
    %v183 = vpack.c.b16 %v157, %v155
    %v184 = vpack.c.b16 %v158, %v156
    %v185 = vpack.c.b16 %v161, %v159
    %v186 = vpack.c.b16 %v162, %v160
    %v187 = vpack.c.b16 %v165, %v163
    %v188 = vpack.c.b16 %v166, %v164
    %v189 = vpack.c.b16 %v169, %v167
    %v190 = vpack.c.b16 %v170, %v168
    %v191 = vpack.c.b16 %v173, %v171
    %v192 = vpack.c.b16 %v174, %v172
    %v193 = vpack.c.b16 %v177, %v175
    %v194 = vpack.c.b16 %v178, %v176
    %211 = vmatprep.subr.bf16.mxu0 %v180
    %212 = vmatpush1.bf16.msra.mxu0 %v179
    %213 = vmatprep.subr.bf16.mxu0 %v182
    %214 = vmatpush1.bf16.msra.mxu0 %v181
    %215 = vmatprep.subr.bf16.mxu0 %v184
    %216 = vmatpush1.bf16.msra.mxu0 %v183
    %217 = vmatprep.subr.bf16.mxu0 %v186
    %218 = vmatpush1.bf16.msra.mxu0 %v185
    %219 = vmatprep.subr.bf16.mxu0 %v188
    %220 = vmatpush1.bf16.msra.mxu0 %v187
    %221 = vmatprep.subr.bf16.mxu0 %v190
    %222 = vmatpush1.bf16.msra.mxu0 %v189
    %223 = vmatprep.subr.bf16.mxu0 %v192
    %224 = vmatpush1.bf16.msra.mxu0 %v191
    %225 = vmatprep.subr.bf16.mxu0 %v194
    %226 = vmatpush1.bf16.msra.mxu0 %v193
    %227 = vmatprep.subr.bf16.mxu0 0
    %228 = vmatpush1.bf16.msra.mxu0 0
    %229 = vmatprep.subr.bf16.mxu0 0
    %230 = vmatpush1.bf16.msra.mxu0 0
    %231 = vmatprep.subr.bf16.mxu0 0
    %232 = vmatpush1.bf16.msra.mxu0 0
    %233 = vmatprep.subr.bf16.mxu0 0
    %234 = vmatpush1.bf16.msra.mxu0 0
    %235 = vmatprep.subr.bf16.mxu0 0
    %236 = vmatpush1.bf16.msra.mxu0 0
    %237 = vmatprep.subr.bf16.mxu0 0
    %238 = vmatpush1.bf16.msra.mxu0 0
    %239 = vmatprep.subr.bf16.mxu0 0
    %240 = vmatpush1.bf16.msra.mxu0 0
    %241 = vmatprep.subr.bf16.mxu0 0
    %242 = vmatpush1.bf16.msra.mxu0 0
    %243 = vmatprep.mubr.bf16.mxu0 0
    %244 = vmatmul.mubr.bf16.gmra.mrb[0].mxu0 %v87
    %v245 = vpop.f32.mrb[0].mxu0
    %v246 = vadd.f32 %v124, %v245
    %v247 = vpop.f32.mrb[0].mxu0
    %v248 = vadd.f32 %v128, %v247
    %v249 = vpop.f32.mrb[0].mxu0
    %v250 = vadd.f32 %v124, %v249
    %v251 = vpop.f32.mrb[0].mxu0
    %v252 = vadd.f32 %v128, %v251
    %253 = vmatprep.mubr.bf16.mxu0 0
    %254 = vmatmul.mubr.bf16.gmra.mrb[0].mxu0 %v88
    %v255 = vpop.f32.mrb[0].mxu0
    %v256 = vadd.f32 %v124, %v255
    %v257 = vpop.f32.mrb[0].mxu0
    %v258 = vadd.f32 %v128, %v257
    %v259 = vpop.f32.mrb[0].mxu0
    %v260 = vadd.f32 %v124, %v259
    %v261 = vpop.f32.mrb[0].mxu0
    %v262 = vadd.f32 %v128, %v261
    %263 = vmatprep.mubr.bf16.mxu0 0
    %264 = vmatmul.mubr.bf16.gmra.mrb[0].mxu0 %v89
    %v265 = vpop.f32.mrb[0].mxu0
    %v266 = vadd.f32 %v124, %v265
    %v267 = vpop.f32.mrb[0].mxu0
    %v268 = vadd.f32 %v128, %v267
    %v269 = vpop.f32.mrb[0].mxu0
    %v270 = vadd.f32 %v124, %v269
    %v271 = vpop.f32.mrb[0].mxu0
    %v272 = vadd.f32 %v128, %v271
    %273 = vmatprep.mubr.bf16.mxu0 0
    %274 = vmatmul.mubr.bf16.gmra.mrb[0].mxu0 %v90
    %v275 = vpop.f32.mrb[0].mxu0
    %v276 = vadd.f32 %v124, %v275
    %v277 = vpop.f32.mrb[0].mxu0
    %v278 = vadd.f32 %v128, %v277
    %v279 = vpop.f32.mrb[0].mxu0
    %v280 = vadd.f32 %v124, %v279
    %v281 = vpop.f32.mrb[0].mxu0
    %v282 = vadd.f32 %v128, %v281
    %283 = vmatprep.mubr.bf16.mxu0 0
    %284 = vmatmul.mubr.bf16.gmra.mrb[0].mxu0 %v91
    %v285 = vpop.f32.mrb[0].mxu0
    %v286 = vadd.f32 %v124, %v285
    %v287 = vpop.f32.mrb[0].mxu0
    %v288 = vadd.f32 %v128, %v287
    %v289 = vpop.f32.mrb[0].mxu0
    %v290 = vadd.f32 %v124, %v289
    %v291 = vpop.f32.mrb[0].mxu0
    %v292 = vadd.f32 %v128, %v291
    %293 = vmatprep.mubr.bf16.mxu0 0
    %294 = vmatmul.mubr.bf16.gmra.mrb[0].mxu0 %v92
    %v295 = vpop.f32.mrb[0].mxu0
    %v296 = vadd.f32 %v124, %v295
    %v297 = vpop.f32.mrb[0].mxu0
    %v298 = vadd.f32 %v128, %v297
    %v299 = vpop.f32.mrb[0].mxu0
    %v300 = vadd.f32 %v124, %v299
    %v301 = vpop.f32.mrb[0].mxu0
    %v302 = vadd.f32 %v128, %v301
    %303 = vmatprep.mubr.bf16.mxu0 0
    %304 = vmatmul.mubr.bf16.gmra.mrb[0].mxu0 %v93
    %v305 = vpop.f32.mrb[0].mxu0
    %v306 = vadd.f32 %v124, %v305
    %v307 = vpop.f32.mrb[0].mxu0
    %v308 = vadd.f32 %v128, %v307
    %v309 = vpop.f32.mrb[0].mxu0
    %v310 = vadd.f32 %v124, %v309
    %v311 = vpop.f32.mrb[0].mxu0
    %v312 = vadd.f32 %v128, %v311
    %313 = vmatprep.mubr.bf16.mxu0 0
    %314 = vmatmul.mubr.bf16.gmra.mrb[0].mxu0 %v94
    %v315 = vpop.f32.mrb[0].mxu0
    %v316 = vadd.f32 %v124, %v315
    %v317 = vpop.f32.mrb[0].mxu0
    %v318 = vadd.f32 %v128, %v317
    %v319 = vpop.f32.mrb[0].mxu0
    %v320 = vadd.f32 %v124, %v319
    %v321 = vpop.f32.mrb[0].mxu0
    %v322 = vadd.f32 %v128, %v321
    %323 = vmatprep.mubr.bf16.mxu0 0
    %324 = vmatmul.mubr.bf16.gmra.mrb[0].mxu0 %v95
    %v325 = vpop.f32.mrb[0].mxu0
    %v326 = vadd.f32 %v124, %v325
    %v327 = vpop.f32.mrb[0].mxu0
    %v328 = vadd.f32 %v128, %v327
    %v329 = vpop.f32.mrb[0].mxu0
    %v330 = vadd.f32 %v124, %v329
    %v331 = vpop.f32.mrb[0].mxu0
    %v332 = vadd.f32 %v128, %v331
    %333 = vmatprep.mubr.bf16.mxu0 0
    %334 = vmatmul.mubr.bf16.gmra.mrb[0].mxu0 %v96
    %v335 = vpop.f32.mrb[0].mxu0
    %v336 = vadd.f32 %v124, %v335
    %v337 = vpop.f32.mrb[0].mxu0
    %v338 = vadd.f32 %v128, %v337
    %v339 = vpop.f32.mrb[0].mxu0
    %v340 = vadd.f32 %v124, %v339
    %v341 = vpop.f32.mrb[0].mxu0
    %v342 = vadd.f32 %v128, %v341
    %343 = vmatprep.mubr.bf16.mxu0 0
    %344 = vmatmul.mubr.bf16.gmra.mrb[0].mxu0 %v97
    %v345 = vpop.f32.mrb[0].mxu0
    %v346 = vadd.f32 %v124, %v345
    %v347 = vpop.f32.mrb[0].mxu0
    %v348 = vadd.f32 %v128, %v347
    %v349 = vpop.f32.mrb[0].mxu0
    %v350 = vadd.f32 %v124, %v349
    %v351 = vpop.f32.mrb[0].mxu0
    %v352 = vadd.f32 %v128, %v351
    %353 = vmatprep.mubr.bf16.mxu0 0
    %354 = vmatmul.mubr.bf16.gmra.mrb[0].mxu0 %v98
    %v355 = vpop.f32.mrb[0].mxu0
    %v356 = vadd.f32 %v124, %v355
    %v357 = vpop.f32.mrb[0].mxu0
    %v358 = vadd.f32 %v128, %v357
    %v359 = vpop.f32.mrb[0].mxu0
    %v360 = vadd.f32 %v124, %v359
    %v361 = vpop.f32.mrb[0].mxu0
    %v362 = vadd.f32 %v128, %v361
    %363 = vmatprep.mubr.bf16.mxu0 0
    %364 = vmatmul.mubr.bf16.gmra.mrb[0].mxu0 %v99
    %v365 = vpop.f32.mrb[0].mxu0
    %v366 = vadd.f32 %v124, %v365
    %v367 = vpop.f32.mrb[0].mxu0
    %v368 = vadd.f32 %v128, %v367
    %v369 = vpop.f32.mrb[0].mxu0
    %v370 = vadd.f32 %v124, %v369
    %v371 = vpop.f32.mrb[0].mxu0
    %v372 = vadd.f32 %v128, %v371
    %373 = vmatprep.mubr.bf16.mxu0 0
    %374 = vmatmul.mubr.bf16.gmra.mrb[0].mxu0 %v100
    %v375 = vpop.f32.mrb[0].mxu0
    %v376 = vadd.f32 %v124, %v375
    %v377 = vpop.f32.mrb[0].mxu0
    %v378 = vadd.f32 %v128, %v377
    %v379 = vpop.f32.mrb[0].mxu0
    %v380 = vadd.f32 %v124, %v379
    %v381 = vpop.f32.mrb[0].mxu0
    %v382 = vadd.f32 %v128, %v381
    %383 = vmatprep.mubr.bf16.mxu0 0
    %384 = vmatmul.mubr.bf16.gmra.mrb[0].mxu0 %v101
    %v385 = vpop.f32.mrb[0].mxu0
    %v386 = vadd.f32 %v124, %v385
    %v387 = vpop.f32.mrb[0].mxu0
    %v388 = vadd.f32 %v128, %v387
    %v389 = vpop.f32.mrb[0].mxu0
    %v390 = vadd.f32 %v124, %v389
    %v391 = vpop.f32.mrb[0].mxu0
    %v392 = vadd.f32 %v128, %v391
    %393 = vmatprep.mubr.bf16.mxu0 0
    %394 = vmatmul.mubr.bf16.gmra.mrb[0].mxu0 %v102
    %v395 = vpop.f32.mrb[0].mxu0
    %v396 = vadd.f32 %v124, %v395
    %v397 = vpop.f32.mrb[0].mxu0
    %v398 = vadd.f32 %v128, %v397
    %v399 = vpop.f32.mrb[0].mxu0
    %v400 = vadd.f32 %v124, %v399
    %v401 = vpop.f32.mrb[0].mxu0
    %v402 = vadd.f32 %v128, %v401
    %403 = vdwg.mxu0
    %404 = vst [vmem:[#allocation8] sm:$0xff] %v246
    %405 = vst [vmem:[#allocation8 + $0x8] sm:$0xff] %v248
    %406 = vst [vmem:[#allocation8 + $0x10] sm:$0xff] %v250
    %407 = vst [vmem:[#allocation8 + $0x18] sm:$0xff] %v252
    %408 = vst [vmem:[#allocation8 + $0x20] sm:$0xff] %v256
    %409 = vst [vmem:[#allocation8 + $0x28] sm:$0xff] %v258
    %410 = vst [vmem:[#allocation8 + $0x30] sm:$0xff] %v260
    %411 = vst [vmem:[#allocation8 + $0x38] sm:$0xff] %v262
    %412 = vst [vmem:[#allocation8 + $0x40] sm:$0xff] %v266
    %413 = vst [vmem:[#allocation8 + $0x48] sm:$0xff] %v268
    %414 = vst [vmem:[#allocation8 + $0x50] sm:$0xff] %v270
    %415 = vst [vmem:[#allocation8 + $0x58] sm:$0xff] %v272
    %416 = vst [vmem:[#allocation8 + $0x60] sm:$0xff] %v276
    %417 = vst [vmem:[#allocation8 + $0x68] sm:$0xff] %v278
    %418 = vst [vmem:[#allocation8 + $0x70] sm:$0xff] %v280
    %419 = vst [vmem:[#allocation8 + $0x78] sm:$0xff] %v282
    %420 = vst [vmem:[#allocation8 + $0x80] sm:$0xff] %v286
    %421 = vst [vmem:[#allocation8 + $0x88] sm:$0xff] %v288
    %422 = vst [vmem:[#allocation8 + $0x90] sm:$0xff] %v290
    %423 = vst [vmem:[#allocation8 + $0x98] sm:$0xff] %v292
    %424 = vst [vmem:[#allocation8 + $0xa0] sm:$0xff] %v296
    %425 = vst [vmem:[#allocation8 + $0xa8] sm:$0xff] %v298
    %426 = vst [vmem:[#allocation8 + $0xb0] sm:$0xff] %v300
    %427 = vst [vmem:[#allocation8 + $0xb8] sm:$0xff] %v302
    %428 = vst [vmem:[#allocation8 + $0xc0] sm:$0xff] %v306
    %429 = vst [vmem:[#allocation8 + $0xc8] sm:$0xff] %v308
    %430 = vst [vmem:[#allocation8 + $0xd0] sm:$0xff] %v310
    %431 = vst [vmem:[#allocation8 + $0xd8] sm:$0xff] %v312
    %432 = vst [vmem:[#allocation8 + $0xe0] sm:$0xff] %v316
    %433 = vst [vmem:[#allocation8 + $0xe8] sm:$0xff] %v318
    %434 = vst [vmem:[#allocation8 + $0xf0] sm:$0xff] %v320
    %435 = vst [vmem:[#allocation8 + $0xf8] sm:$0xff] %v322
    %436 = vst [vmem:[#allocation8 + $0x100] sm:$0xff] %v326
    %437 = vst [vmem:[#allocation8 + $0x108] sm:$0xff] %v328
    %438 = vst [vmem:[#allocation8 + $0x110] sm:$0xff] %v330
    %439 = vst [vmem:[#allocation8 + $0x118] sm:$0xff] %v332
    %440 = vst [vmem:[#allocation8 + $0x120] sm:$0xff] %v336
    %441 = vst [vmem:[#allocation8 + $0x128] sm:$0xff] %v338
    %442 = vst [vmem:[#allocation8 + $0x130] sm:$0xff] %v340
    %443 = vst [vmem:[#allocation8 + $0x138] sm:$0xff] %v342
    %444 = vst [vmem:[#allocation8 + $0x140] sm:$0xff] %v346
    %445 = vst [vmem:[#allocation8 + $0x148] sm:$0xff] %v348
    %446 = vst [vmem:[#allocation8 + $0x150] sm:$0xff] %v350
    %447 = vst [vmem:[#allocation8 + $0x158] sm:$0xff] %v352
    %448 = vst [vmem:[#allocation8 + $0x160] sm:$0xff] %v356
    %449 = vst [vmem:[#allocation8 + $0x168] sm:$0xff] %v358
    %450 = vst [vmem:[#allocation8 + $0x170] sm:$0xff] %v360
    %451 = vst [vmem:[#allocation8 + $0x178] sm:$0xff] %v362
    %452 = vst [vmem:[#allocation8 + $0x180] sm:$0xff] %v366
    %453 = vst [vmem:[#allocation8 + $0x188] sm:$0xff] %v368
    %454 = vst [vmem:[#allocation8 + $0x190] sm:$0xff] %v370
    %455 = vst [vmem:[#allocation8 + $0x198] sm:$0xff] %v372
    %456 = vst [vmem:[#allocation8 + $0x1a0] sm:$0xff] %v376
    %457 = vst [vmem:[#allocation8 + $0x1a8] sm:$0xff] %v378
    %458 = vst [vmem:[#allocation8 + $0x1b0] sm:$0xff] %v380
    %459 = vst [vmem:[#allocation8 + $0x1b8] sm:$0xff] %v382
    %460 = vst [vmem:[#allocation8 + $0x1c0] sm:$0xff] %v386
    %461 = vst [vmem:[#allocation8 + $0x1c8] sm:$0xff] %v388
    %462 = vst [vmem:[#allocation8 + $0x1d0] sm:$0xff] %v390
    %463 = vst [vmem:[#allocation8 + $0x1d8] sm:$0xff] %v392
    %464 = vst [vmem:[#allocation8 + $0x1e0] sm:$0xff] %v396
    %465 = vst [vmem:[#allocation8 + $0x1e8] sm:$0xff] %v398
    %466 = vst [vmem:[#allocation8 + $0x1f0] sm:$0xff] %v400
    %467 = vst [vmem:[#allocation8 + $0x1f8] sm:$0xff] %v402
    // Predicated region
    $region26: #{lstm_forward.5} parent=1 // pred_check
      _
    $region27: #{lstm_forward.5} parent=1 // pred_check_branch
      %469 = sbr.rel (0) target = $region29
    $region28: #{lstm_forward.5} parent=1 // pred_region
      %s471 = ssub.s32 8192, 8192
      %472 = vsyncadd [#allocation4], %s471
      %s473 = sshll.u32 [#allocation8], 4
      %s474 = int_to_ptr.vmem [resolvable:$true] %s473
      %479 = dma.vmem_to_hbm [thread:$0]  %s474, 8192, %s3, [#allocation4], 256, 256, 16
    $region29: #{lstm_forward.5} parent=1 // pred_fallthru
      _
    // Predicated region
    $region30: #{lstm_forward.5} parent=1 // pred_check
      _
    $region31: #{lstm_forward.5} parent=1 // pred_check_branch
      %481 = sbr.rel (0) target = $region33
    $region32: #{lstm_forward.5} parent=1 // pred_region
      %482 = dma.done [#allocation4], 8192
    $region33: #{lstm_forward.5} parent=1 // pred_fallthru
      _
    %483 = vsyncpa [#allocation3], 1
    %484 = vsyncpa [#allocation6], 1
    %485 = vsyncpa [#allocation4], 1

</llo_original>
